<compile_context>
chip_gen: v5e
topology: v5e:2x2
jax: 0.10.0
libtpu: 0.0.40
codegen_flags: <defaults>
</compile_context>

<pallas_src>
import jax
import jax.numpy as jnp
from jax.experimental import pallas as pl
from jax.experimental.pallas import tpu as pltpu

HIGH = jax.lax.Precision.HIGHEST


def _round_up(x, m):
    return (x + m - 1) // m * m


# ---------------------------------------------------------------------------
# Pallas kernel (transposed layout: output channels on sublanes, positions on lanes)
#   out[n, :, ptile] = (sum_k att[n,k] * experts[k]) @ patches[n, :, ptile] + bias
# ---------------------------------------------------------------------------
def _cond_matmul_kernel(att_ref, p_ref, w_ref, b_ref, o_ref, wmix_ref):
    # att_ref : SMEM (N, K)  f32        softmax attention per sample
    # p_ref   : VMEM (CKp, TP) bf16     im2col tile (features x positions)
    # w_ref   : VMEM (K, Om, CKp) bf16  experts (+folded static weight); resident
    # b_ref   : VMEM (Om, 1) f32        static-conv bias, added in f32 epilogue
    # o_ref   : VMEM (Om, TP)           output tile (positions lane-dense)
    # wmix_ref: VMEM (Om, CKp) bf16     per-sample mixed weight (scratch)
    n = pl.program_id(0)

    @pl.when(pl.program_id(1) == 0)
    def _mix():
        num_experts = w_ref.shape[0]
        acc = att_ref[n, 0] * w_ref[0].astype(jnp.float32)
        for k in range(1, num_experts):
            acc = acc + att_ref[n, k] * w_ref[k].astype(jnp.float32)
        wmix_ref[...] = acc.astype(wmix_ref.dtype)

    acc = jnp.dot(wmix_ref[...], p_ref[...], preferred_element_type=jnp.float32)
    o_ref[...] = (acc + b_ref[...]).astype(o_ref.dtype)


def _select_tile_and_vmem(P, CKp, Om, K, out_itemsize):
    """Generation-aware tile size + scoped-VMEM budget (128 MiB on v5e/v6e, 64 MiB on v7x)."""
    try:
        cap = int(pltpu.get_tpu_info().vmem_capacity_bytes)
    except Exception:
        cap = 64 * 1024 * 1024                      # v7x-safe fallback
    budget = int(cap * 0.8)                         # room for compiler scratch / semaphores
    P128 = _round_up(P, 128)
    resident = (K * Om * CKp * 2                    # experts, single-buffered bf16
                + Om * CKp * 2                      # wmix scratch bf16
                + Om * 128 * 4)                     # bias, lane-padded f32
    headroom = 2 << 20
    tp = min(128, P128)
    for cand in (1024, 512, 256, 128):
        cand = min(cand, P128)
        per_tile = 2 * CKp * cand * 2 + 2 * Om * cand * out_itemsize
        if resident + per_tile + headroom <= budget:
            tp = cand
            break
    per_tile = 2 * CKp * tp * 2 + 2 * Om * tp * out_itemsize
    # Budget the experts x2 in the limit so the non-Buffered(1) fallback still fits.
    need = resident + K * Om * CKp * 2 + per_tile + headroom
    vmem_limit = int(min(budget, max(need, 32 * 1024 * 1024)))
    return tp, vmem_limit


def dyn_conv_matmul(att, patches_t, experts, bias, out_dtype, *, tp, vmem_limit):
    """out[n] = (sum_k att[n,k] * experts[k]) @ patches_t[n] + bias, via Pallas."""
    N, CKp, Pp = patches_t.shape
    K, Om, _ = experts.shape
    grid = (N, Pp // tp)

    def build(resident_kwargs):
        in_specs = [
            pl.BlockSpec(memory_space=pltpu.MemorySpace.SMEM),             # att (N,K)
            pl.BlockSpec((None, CKp, tp), lambda n, p: (n, 0, p)),         # patches tile
            pl.BlockSpec((K, Om, CKp), lambda n, p: (0, 0, 0),             # experts (resident)
                         **resident_kwargs),
            pl.BlockSpec((Om, 1), lambda n, p: (0, 0), **resident_kwargs),  # bias (resident)
        ]
        return pl.pallas_call(
            _cond_matmul_kernel,
            out_shape=jax.ShapeDtypeStruct((N, Om, Pp), out_dtype),
            grid=grid,
            in_specs=in_specs,
            out_specs=pl.BlockSpec((None, Om, tp), lambda n, p: (n, 0, p)),
            scratch_shapes=[pltpu.VMEM((Om, CKp), jnp.bfloat16)],
            compiler_params=pltpu.CompilerParams(
                dimension_semantics=("parallel", "arbitrary"),
                vmem_limit_bytes=vmem_limit),
        )

    try:
        # Constant index_map => single buffer is enough; halves the biggest VMEM consumer.
        out = build({"pipeline_mode": pl.Buffered(1)})(att, patches_t, experts, bias)
        out = jax.block_until_ready(out)
    except Exception:
        # Fallback for jax versions without pipeline_mode / Buffered(1) support.
        out = build({})(att, patches_t, experts, bias)
    return out


# ---------------------------------------------------------------------------
# Glue: im2col for NCDHW (emitted directly in (N, CK, P) order), attention logits
# ---------------------------------------------------------------------------
def extract_patches_t(x, ksize, stride, padding, dtype=None):
    """im2col for NCDHW input, transposed layout (N, C*kprod, P).
    Feature order is (c, kd, kh, kw) with c slowest, matching weight.reshape(O, -1)."""
    N, C, D, H, W = x.shape
    kd, kh, kw = ksize
    sd, sh, sw = stride
    pd, ph, pw = padding
    if dtype is not None:
        x = x.astype(dtype)                  # cast BEFORE the kprod-x expansion
    xp = jnp.pad(x, ((0, 0), (0, 0), (pd, pd), (ph, ph), (pw, pw)))
    Do = (D + 2 * pd - kd) // sd + 1
    Ho = (H + 2 * ph - kh) // sh + 1
    Wo = (W + 2 * pw - kw) // sw + 1
    slabs = []
    for i in range(kd):
        for j in range(kh):
            for l in range(kw):
                slabs.append(
                    xp[:, :, i:i + (Do - 1) * sd + 1:sd,
                          j:j + (Ho - 1) * sh + 1:sh,
                          l:l + (Wo - 1) * sw + 1:sw])
    pt = jnp.stack(slabs, axis=2)                       # (N, C, kprod, Do, Ho, Wo)
    pt = pt.reshape(N, C * kd * kh * kw, Do * Ho * Wo)  # (N, CK, P) -- free reshape
    return pt, (Do, Ho, Wo)


def _attention_logits(x, params):
    """AdaptiveAvgPool3d(1)(Conv3d(x)) == mean over positions of the conv;
    computed with tiny XLA convs (no im2col blow-up). (AdaptiveMaxPool3d in the
    original __init__ is unused in forward.)"""
    dn = ("NCDHW", "OIDHW", "NCDHW")

    def conv_mean(w, b, pad):
        y = jax.lax.conv_general_dilated(
            x, w, window_strides=(1, 1, 1),
            padding=[(pad[0], pad[0]), (pad[1], pad[1]), (pad[2], pad[2])],
            dimension_numbers=dn, precision=HIGH)
        return y.mean(axis=(2, 3, 4)) + b[None, :]

    return (conv_mean(params["att_w1"], params["att_b1"], (0, 0, 0))
            + conv_mean(params["att_w2"], params["att_b2"], (1, 1, 1))
            + conv_mean(params["att_w3"], params["att_b3"], (2, 1, 1)))


def cond_conv3d_forward(x, params, kernel_size, stride, padding):
    N, C = x.shape[:2]
    O = params["w_static"].shape[0]
    K = params["cond_w"].shape[0]
    kprod = kernel_size[0] * kernel_size[1] * kernel_size[2]
    CK = C * kprod

    # ---- Attention branch ----
    att = jax.nn.softmax(_attention_logits(x, params), axis=-1)        # (N, K) f32

    # ---- Expert table in transposed (K, O, CK) layout; fold static weight once ----
    # softmax(att) sums to 1, so adding w_static to every expert == adding it once
    # after mixing.  Output dim pads only to 8 sublanes; CK pads to 128 lanes.
    CKp = _round_up(CK, 128)
    Om = _round_up(O, 8)
    cw = params["cond_w"].reshape(K, O, CK) + params["w_static"].reshape(1, O, CK)
    experts = jnp.pad(cw, ((0, 0), (0, Om - O), (0, CKp - CK))).astype(jnp.bfloat16)
    bias = jnp.pad(params["b_static"].astype(jnp.float32), (0, Om - O)).reshape(Om, 1)

    # ---- im2col patches (bf16), transposed layout, padded once ----
    patches_t, (Do, Ho, Wo) = extract_patches_t(x, kernel_size, stride, padding,
                                                dtype=jnp.bfloat16)
    P = Do * Ho * Wo

    out_dtype = x.dtype   # use jnp.bfloat16 here for large P*O configs
    tp, vmem_limit = _select_tile_and_vmem(P, CKp, Om, K, jnp.dtype(out_dtype).itemsize)
    Pp = _round_up(P, tp)
    patches_t = jnp.pad(patches_t, ((0, 0), (0, CKp - CK), (0, Pp - P)))  # (N, CKp, Pp)

    # ---- Hot path: per-sample mixture-of-experts matmul in Pallas ----
    out = dyn_conv_matmul(att, patches_t, experts, bias, out_dtype,
                          tp=tp, vmem_limit=vmem_limit)                  # (N, Om, Pp)
    out = out[:, :O, :P].reshape(N, O, Do, Ho, Wo)                       # no transpose needed
    return out


# ---------------------------------------------------------------------------
# Pure-JAX reference (lax convolutions, mirrors the PyTorch forward exactly)
# ---------------------------------------------------------------------------
def reference_forward(x, params, kernel_size, stride, padding):
    dn = ("NCDHW", "OIDHW", "NCDHW")

    def conv(inp, w, st, pad, groups=1):
        return jax.lax.conv_general_dilated(
            inp, w, window_strides=st,
            padding=[(pad[0], pad[0]), (pad[1], pad[1]), (pad[2], pad[2])],
            dimension_numbers=dn, feature_group_count=groups, precision=HIGH)

    N, C, D, H, W = x.shape
    O = params["w_static"].shape[0]
    K = params["cond_w"].shape[0]

    r = conv(x, params["w_static"], stride, padding) + params["b_static"].reshape(1, O, 1, 1, 1)

    x1 = conv(x, params["att_w1"], (1, 1, 1), (0, 0, 0)) + params["att_b1"].reshape(1, K, 1, 1, 1)
    x2 = conv(x, params["att_w2"], (1, 1, 1), (1, 1, 1)) + params["att_b2"].reshape(1, K, 1, 1, 1)
    x3 = conv(x, params["att_w3"], (1, 1, 1), (2, 1, 1)) + params["att_b3"].reshape(1, K, 1, 1, 1)
    xa = x1.mean((2, 3, 4)) + x2.mean((2, 3, 4)) + x3.mean((2, 3, 4))
    att = jax.nn.softmax(xa, axis=-1)

    agg = jnp.matmul(att, params["cond_w"].reshape(K, -1), precision=HIGH)
    agg = agg.reshape(N * O, C, *kernel_size)
    xg = x.reshape(1, N * C, D, H, W)
    out = conv(xg, agg, stride, padding, groups=N)
    _, _, Do, Ho, Wo = out.shape
    out = out.reshape(N, O, Do, Ho, Wo)
    return out + r


# ---------------------------------------------------------------------------
if __name__ == "__main__":
    N, C, O, K = 2, 4, 8, 4
    D = H = W = 8
    ks = (3, 3, 3)
    stride = (1, 1, 1)
    pad = (1, 1, 1)

    key = jax.random.PRNGKey(0)
    k = jax.random.split(key, 10)
    params = dict(
        w_static=0.1 * jax.random.normal(k[0], (O, C) + ks, jnp.float32),
        b_static=0.1 * jax.random.normal(k[1], (O,), jnp.float32),
        att_w1=0.1 * jax.random.normal(k[2], (K, C, 1, 1, 1), jnp.float32),
        att_b1=0.1 * jax.random.normal(k[3], (K,), jnp.float32),
        att_w2=0.1 * jax.random.normal(k[4], (K, C, 3, 3, 3), jnp.float32),
        att_b2=0.1 * jax.random.normal(k[5], (K,), jnp.float32),
        att_w3=0.1 * jax.random.normal(k[6], (K, C, 5, 3, 3), jnp.float32),
        att_b3=0.1 * jax.random.normal(k[7], (K,), jnp.float32),
        cond_w=0.1 * jax.random.normal(k[8], (K, O, C) + ks, jnp.float32),
    )
    x = jax.random.normal(k[9], (N, C, D, H, W), jnp.float32)

    out = cond_conv3d_forward(x, params, ks, stride, pad)
    out = jax.block_until_ready(out)

    ref = jax.block_until_ready(reference_forward(x, params, ks, stride, pad))
    assert out.shape == ref.shape == (N, O, D, H, W), (out.shape, ref.shape)
    if not jnp.allclose(out.astype(jnp.float32), ref, rtol=2e-2, atol=2e-2):
        raise AssertionError(
            f"mismatch, max abs err {float(jnp.max(jnp.abs(out.astype(jnp.float32) - ref)))}")
    print("KERNEL_OK")
</pallas_src>

<mosaic_0001>
module attributes {stable_mosaic.version = 11 : i64} {
  func.func @_cond_matmul_kernel(%arg0: i32, %arg1: i32, %arg2: memref<2x4xf32, #tpu.memory_space<smem>>, %arg3: memref<1x128x512xbf16, #tpu.memory_space<vmem>>, %arg4: memref<4x8x128xbf16, #tpu.memory_space<vmem>>, %arg5: memref<8x1xf32, #tpu.memory_space<vmem>>, %arg6: memref<1x8x512xf32, #tpu.memory_space<vmem>>, %arg7: memref<8x128xbf16, #tpu.memory_space<vmem>>) attributes {dimension_semantics = [#tpu.dimension_semantics<parallel>, #tpu.dimension_semantics<arbitrary>], iteration_bounds = array<i64: 2, 1>, scalar_prefetch = 0 : i64, scratch_operands = 1 : i64, tpu.core_type = #tpu.core_type<tc>, window_params = [{transform_indices = @transform_0, window_bounds = array<i64: 2, 4>}, {transform_indices = @transform_1, window_bounds = array<i64: 1, 128, 512>}, {pipeline_mode = #tpu.pipeline_mode<synchronous>, transform_indices = @transform_2, window_bounds = array<i64: 4, 8, 128>}, {pipeline_mode = #tpu.pipeline_mode<synchronous>, transform_indices = @transform_3, window_bounds = array<i64: 8, 1>}, {transform_indices = @transform_4, window_bounds = array<i64: 1, 8, 512>}]} {
    %c0_i32 = arith.constant 0 : i32
    %0 = arith.cmpi eq, %arg1, %c0_i32 : i32
    %1 = arith.extui %0 : i1 to i32
    %c0_i32_0 = arith.constant 0 : i32
    %2 = arith.cmpi ne, %1, %c0_i32_0 : i32
    scf.if %2 {
      %13 = arith.index_cast %arg0 : i32 to index
      %c0_10 = arith.constant 0 : index
      %14 = memref.load %arg2[%13, %c0_10] : memref<2x4xf32, #tpu.memory_space<smem>>
      %c0_11 = arith.constant 0 : index
      %c0_12 = arith.constant 0 : index
      %c0_13 = arith.constant 0 : index
      %15 = vector.load %arg4[%c0_11, %c0_12, %c0_13] : memref<4x8x128xbf16, #tpu.memory_space<vmem>>, vector<1x8x128xbf16>
      %16 = vector.shape_cast %15 : vector<1x8x128xbf16> to vector<8x128xbf16>
      %17 = arith.extf %16 : vector<8x128xbf16> to vector<8x128xf32>
      %18 = vector.broadcast %14 : f32 to vector<8x128xf32>
      %19 = arith.mulf %18, %17 : vector<8x128xf32>
      %20 = arith.index_cast %arg0 : i32 to index
      %c1 = arith.constant 1 : index
      %21 = memref.load %arg2[%20, %c1] : memref<2x4xf32, #tpu.memory_space<smem>>
      %c1_14 = arith.constant 1 : index
      %c0_15 = arith.constant 0 : index
      %c0_16 = arith.constant 0 : index
      %22 = vector.load %arg4[%c1_14, %c0_15, %c0_16] : memref<4x8x128xbf16, #tpu.memory_space<vmem>>, vector<1x8x128xbf16>
      %23 = vector.shape_cast %22 : vector<1x8x128xbf16> to vector<8x128xbf16>
      %24 = arith.extf %23 : vector<8x128xbf16> to vector<8x128xf32>
      %25 = vector.broadcast %21 : f32 to vector<8x128xf32>
      %26 = arith.mulf %25, %24 : vector<8x128xf32>
      %27 = arith.addf %19, %26 : vector<8x128xf32>
      %28 = arith.index_cast %arg0 : i32 to index
      %c2 = arith.constant 2 : index
      %29 = memref.load %arg2[%28, %c2] : memref<2x4xf32, #tpu.memory_space<smem>>
      %c2_17 = arith.constant 2 : index
      %c0_18 = arith.constant 0 : index
      %c0_19 = arith.constant 0 : index
      %30 = vector.load %arg4[%c2_17, %c0_18, %c0_19] : memref<4x8x128xbf16, #tpu.memory_space<vmem>>, vector<1x8x128xbf16>
      %31 = vector.shape_cast %30 : vector<1x8x128xbf16> to vector<8x128xbf16>
      %32 = arith.extf %31 : vector<8x128xbf16> to vector<8x128xf32>
      %33 = vector.broadcast %29 : f32 to vector<8x128xf32>
      %34 = arith.mulf %33, %32 : vector<8x128xf32>
      %35 = arith.addf %27, %34 : vector<8x128xf32>
      %36 = arith.index_cast %arg0 : i32 to index
      %c3 = arith.constant 3 : index
      %37 = memref.load %arg2[%36, %c3] : memref<2x4xf32, #tpu.memory_space<smem>>
      %c3_20 = arith.constant 3 : index
      %c0_21 = arith.constant 0 : index
      %c0_22 = arith.constant 0 : index
      %38 = vector.load %arg4[%c3_20, %c0_21, %c0_22] : memref<4x8x128xbf16, #tpu.memory_space<vmem>>, vector<1x8x128xbf16>
      %39 = vector.shape_cast %38 : vector<1x8x128xbf16> to vector<8x128xbf16>
      %40 = arith.extf %39 : vector<8x128xbf16> to vector<8x128xf32>
      %41 = vector.broadcast %37 : f32 to vector<8x128xf32>
      %42 = arith.mulf %41, %40 : vector<8x128xf32>
      %43 = arith.addf %35, %42 : vector<8x128xf32>
      %44 = arith.truncf %43 : vector<8x128xf32> to vector<8x128xbf16>
      %c0_23 = arith.constant 0 : index
      %c0_24 = arith.constant 0 : index
      %45 = vector.load %arg7[%c0_23, %c0_24] : memref<8x128xbf16, #tpu.memory_space<vmem>>, vector<8x128xbf16>
      tpu.vector_store %arg7[%c0_23, %c0_24], %44 {strides = array<i32>} : memref<8x128xbf16, #tpu.memory_space<vmem>>, vector<8x128xbf16>,
    } else {
    }
    %c0 = arith.constant 0 : index
    %c0_1 = arith.constant 0 : index
    %3 = vector.load %arg7[%c0, %c0_1] : memref<8x128xbf16, #tpu.memory_space<vmem>>, vector<8x128xbf16>
    %c0_2 = arith.constant 0 : index
    %c0_3 = arith.constant 0 : index
    %c0_4 = arith.constant 0 : index
    %4 = vector.load %arg3[%c0_2, %c0_3, %c0_4] : memref<1x128x512xbf16, #tpu.memory_space<vmem>>, vector<1x128x512xbf16>
    %5 = vector.shape_cast %4 : vector<1x128x512xbf16> to vector<128x512xbf16>
    %cst = arith.constant dense<0.000000e+00> : vector<8x512xf32>
    %6 = tpu.matmul %3, %5, %cst {dimension_numbers = #tpu.dot_dimension_numbers<[1], [0], [0], [1], [0, 0, 1, 1], [], []>} : vector<8x128xbf16>, vector<128x512xbf16>, vector<8x512xf32> -> vector<8x512xf32>
    %c0_5 = arith.constant 0 : index
    %c0_6 = arith.constant 0 : index
    %7 = vector.load %arg5[%c0_5, %c0_6] : memref<8x1xf32, #tpu.memory_space<vmem>>, vector<8x1xf32>
    %8 = vector.broadcast %7 : vector<8x1xf32> to vector<8x512xf32>
    %9 = arith.addf %6, %8 : vector<8x512xf32>
    %c0_7 = arith.constant 0 : index
    %c0_8 = arith.constant 0 : index
    %c0_9 = arith.constant 0 : index
    %10 = vector.load %arg6[%c0_7, %c0_8, %c0_9] : memref<1x8x512xf32, #tpu.memory_space<vmem>>, vector<1x8x512xf32>
    %11 = vector.shape_cast %10 : vector<1x8x512xf32> to vector<8x512xf32>
    %12 = vector.shape_cast %9 : vector<8x512xf32> to vector<1x8x512xf32>
    tpu.vector_store %arg6[%c0_7, %c0_8, %c0_9], %12 {strides = array<i32>} : memref<1x8x512xf32, #tpu.memory_space<vmem>>, vector<1x8x512xf32>,
    return
  }
  func.func @transform_0(%arg0: i32, %arg1: i32) -> (i32, i32) {
    %c0_i32 = arith.constant 0 : i32
    %c0_i32_0 = arith.constant 0 : i32
    %c0_i32_1 = arith.constant 0 : i32
    return %c0_i32, %c0_i32_0 : i32, i32
  }
  func.func @transform_1(%arg0: i32, %arg1: i32) -> (i32, i32, i32) {
    %c0_i32 = arith.constant 0 : i32
    %c0_i32_0 = arith.constant 0 : i32
    return %arg0, %c0_i32, %arg1 : i32, i32, i32
  }
  func.func @transform_2(%arg0: i32, %arg1: i32) -> (i32, i32, i32) {
    %c0_i32 = arith.constant 0 : i32
    %c0_i32_0 = arith.constant 0 : i32
    %c0_i32_1 = arith.constant 0 : i32
    %c0_i32_2 = arith.constant 0 : i32
    return %c0_i32, %c0_i32_0, %c0_i32_1 : i32, i32, i32
  }
  func.func @transform_3(%arg0: i32, %arg1: i32) -> (i32, i32) {
    %c0_i32 = arith.constant 0 : i32
    %c0_i32_0 = arith.constant 0 : i32
    %c0_i32_1 = arith.constant 0 : i32
    return %c0_i32, %c0_i32_0 : i32, i32
  }
  func.func @transform_4(%arg0: i32, %arg1: i32) -> (i32, i32, i32) {
    %c0_i32 = arith.constant 0 : i32
    %c0_i32_0 = arith.constant 0 : i32
    return %arg0, %c0_i32, %arg1 : i32, i32, i32
  }
}

module attributes {stable_mosaic.version = 11 : i64} {
  func.func @_cond_matmul_kernel(%arg0: i32, %arg1: i32, %arg2: memref<2x4xf32, #tpu.memory_space<smem>>, %arg3: memref<1x128x512xbf16, #tpu.memory_space<vmem>>, %arg4: memref<4x8x128xbf16, #tpu.memory_space<vmem>>, %arg5: memref<8x1xf32, #tpu.memory_space<vmem>>, %arg6: memref<1x8x512xf32, #tpu.memory_space<vmem>>, %arg7: memref<8x128xbf16, #tpu.memory_space<vmem>>) attributes {dimension_semantics = [#tpu.dimension_semantics<parallel>, #tpu.dimension_semantics<arbitrary>], iteration_bounds = array<i64: 2, 1>, scalar_prefetch = 0 : i64, scratch_operands = 1 : i64, tpu.core_type = #tpu.core_type<tc>, window_params = [{transform_indices = @transform_0, window_bounds = array<i64: 2, 4>}, {transform_indices = @transform_1, window_bounds = array<i64: 1, 128, 512>}, {pipeline_mode = #tpu.pipeline_mode<synchronous>, transform_indices = @transform_2, window_bounds = array<i64: 4, 8, 128>}, {pipeline_mode = #tpu.pipeline_mode<synchronous>, transform_indices = @transform_3, window_bounds = array<i64: 8, 1>}, {transform_indices = @transform_4, window_bounds = array<i64: 1, 8, 512>}]} {
    %c0_i32 = arith.constant 0 : i32
    %0 = arith.cmpi eq, %arg1, %c0_i32 : i32
    %1 = arith.extui %0 : i1 to i32
    %c0_i32_0 = arith.constant 0 : i32
    %2 = arith.cmpi ne, %1, %c0_i32_0 : i32
    scf.if %2 {
      %13 = arith.index_cast %arg0 : i32 to index
      %c0_10 = arith.constant 0 : index
      %14 = memref.load %arg2[%13, %c0_10] : memref<2x4xf32, #tpu.memory_space<smem>>
      %c0_11 = arith.constant 0 : index
      %c0_12 = arith.constant 0 : index
      %c0_13 = arith.constant 0 : index
      %15 = vector.load %arg4[%c0_11, %c0_12, %c0_13] : memref<4x8x128xbf16, #tpu.memory_space<vmem>>, vector<1x8x128xbf16>
      %16 = vector.shape_cast %15 : vector<1x8x128xbf16> to vector<8x128xbf16>
      %17 = arith.extf %16 : vector<8x128xbf16> to vector<8x128xf32>
      %18 = vector.broadcast %14 : f32 to vector<8x128xf32>
      %19 = arith.mulf %18, %17 : vector<8x128xf32>
      %20 = arith.index_cast %arg0 : i32 to index
      %c1 = arith.constant 1 : index
      %21 = memref.load %arg2[%20, %c1] : memref<2x4xf32, #tpu.memory_space<smem>>
      %c1_14 = arith.constant 1 : index
      %c0_15 = arith.constant 0 : index
      %c0_16 = arith.constant 0 : index
      %22 = vector.load %arg4[%c1_14, %c0_15, %c0_16] : memref<4x8x128xbf16, #tpu.memory_space<vmem>>, vector<1x8x128xbf16>
      %23 = vector.shape_cast %22 : vector<1x8x128xbf16> to vector<8x128xbf16>
      %24 = arith.extf %23 : vector<8x128xbf16> to vector<8x128xf32>
      %25 = vector.broadcast %21 : f32 to vector<8x128xf32>
      %26 = arith.mulf %25, %24 : vector<8x128xf32>
      %27 = arith.addf %19, %26 : vector<8x128xf32>
      %28 = arith.index_cast %arg0 : i32 to index
      %c2 = arith.constant 2 : index
      %29 = memref.load %arg2[%28, %c2] : memref<2x4xf32, #tpu.memory_space<smem>>
      %c2_17 = arith.constant 2 : index
      %c0_18 = arith.constant 0 : index
      %c0_19 = arith.constant 0 : index
      %30 = vector.load %arg4[%c2_17, %c0_18, %c0_19] : memref<4x8x128xbf16, #tpu.memory_space<vmem>>, vector<1x8x128xbf16>
      %31 = vector.shape_cast %30 : vector<1x8x128xbf16> to vector<8x128xbf16>
      %32 = arith.extf %31 : vector<8x128xbf16> to vector<8x128xf32>
      %33 = vector.broadcast %29 : f32 to vector<8x128xf32>
      %34 = arith.mulf %33, %32 : vector<8x128xf32>
      %35 = arith.addf %27, %34 : vector<8x128xf32>
      %36 = arith.index_cast %arg0 : i32 to index
      %c3 = arith.constant 3 : index
      %37 = memref.load %arg2[%36, %c3] : memref<2x4xf32, #tpu.memory_space<smem>>
      %c3_20 = arith.constant 3 : index
      %c0_21 = arith.constant 0 : index
      %c0_22 = arith.constant 0 : index
      %38 = vector.load %arg4[%c3_20, %c0_21, %c0_22] : memref<4x8x128xbf16, #tpu.memory_space<vmem>>, vector<1x8x128xbf16>
      %39 = vector.shape_cast %38 : vector<1x8x128xbf16> to vector<8x128xbf16>
      %40 = arith.extf %39 : vector<8x128xbf16> to vector<8x128xf32>
      %41 = vector.broadcast %37 : f32 to vector<8x128xf32>
      %42 = arith.mulf %41, %40 : vector<8x128xf32>
      %43 = arith.addf %35, %42 : vector<8x128xf32>
      %44 = arith.truncf %43 : vector<8x128xf32> to vector<8x128xbf16>
      %c0_23 = arith.constant 0 : index
      %c0_24 = arith.constant 0 : index
      %45 = vector.load %arg7[%c0_23, %c0_24] : memref<8x128xbf16, #tpu.memory_space<vmem>>, vector<8x128xbf16>
      tpu.vector_store %arg7[%c0_23, %c0_24], %44 {strides = array<i32>} : memref<8x128xbf16, #tpu.memory_space<vmem>>, vector<8x128xbf16>,
    } else {
    }
    %c0 = arith.constant 0 : index
    %c0_1 = arith.constant 0 : index
    %3 = vector.load %arg7[%c0, %c0_1] : memref<8x128xbf16, #tpu.memory_space<vmem>>, vector<8x128xbf16>
    %c0_2 = arith.constant 0 : index
    %c0_3 = arith.constant 0 : index
    %c0_4 = arith.constant 0 : index
    %4 = vector.load %arg3[%c0_2, %c0_3, %c0_4] : memref<1x128x512xbf16, #tpu.memory_space<vmem>>, vector<1x128x512xbf16>
    %5 = vector.shape_cast %4 : vector<1x128x512xbf16> to vector<128x512xbf16>
    %cst = arith.constant dense<0.000000e+00> : vector<8x512xf32>
    %6 = tpu.matmul %3, %5, %cst {dimension_numbers = #tpu.dot_dimension_numbers<[1], [0], [0], [1], [0, 0, 1, 1], [], []>} : vector<8x128xbf16>, vector<128x512xbf16>, vector<8x512xf32> -> vector<8x512xf32>
    %c0_5 = arith.constant 0 : index
    %c0_6 = arith.constant 0 : index
    %7 = vector.load %arg5[%c0_5, %c0_6] : memref<8x1xf32, #tpu.memory_space<vmem>>, vector<8x1xf32>
    %8 = vector.broadcast %7 : vector<8x1xf32> to vector<8x512xf32>
    %9 = arith.addf %6, %8 : vector<8x512xf32>
    %c0_7 = arith.constant 0 : index
    %c0_8 = arith.constant 0 : index
    %c0_9 = arith.constant 0 : index
    %10 = vector.load %arg6[%c0_7, %c0_8, %c0_9] : memref<1x8x512xf32, #tpu.memory_space<vmem>>, vector<1x8x512xf32>
    %11 = vector.shape_cast %10 : vector<1x8x512xf32> to vector<8x512xf32>
    %12 = vector.shape_cast %9 : vector<8x512xf32> to vector<1x8x512xf32>
    tpu.vector_store %arg6[%c0_7, %c0_8, %c0_9], %12 {strides = array<i32>} : memref<1x8x512xf32, #tpu.memory_space<vmem>>, vector<1x8x512xf32>,
    return
  }
  func.func @transform_0(%arg0: i32, %arg1: i32) -> (i32, i32) {
    %c0_i32 = arith.constant 0 : i32
    %c0_i32_0 = arith.constant 0 : i32
    %c0_i32_1 = arith.constant 0 : i32
    return %c0_i32, %c0_i32_0 : i32, i32
  }
  func.func @transform_1(%arg0: i32, %arg1: i32) -> (i32, i32, i32) {
    %c0_i32 = arith.constant 0 : i32
    %c0_i32_0 = arith.constant 0 : i32
    return %arg0, %c0_i32, %arg1 : i32, i32, i32
  }
  func.func @transform_2(%arg0: i32, %arg1: i32) -> (i32, i32, i32) {
    %c0_i32 = arith.constant 0 : i32
    %c0_i32_0 = arith.constant 0 : i32
    %c0_i32_1 = arith.constant 0 : i32
    %c0_i32_2 = arith.constant 0 : i32
    return %c0_i32, %c0_i32_0, %c0_i32_1 : i32, i32, i32
  }
  func.func @transform_3(%arg0: i32, %arg1: i32) -> (i32, i32) {
    %c0_i32 = arith.constant 0 : i32
    %c0_i32_0 = arith.constant 0 : i32
    %c0_i32_1 = arith.constant 0 : i32
    return %c0_i32, %c0_i32_0 : i32, i32
  }
  func.func @transform_4(%arg0: i32, %arg1: i32) -> (i32, i32, i32) {
    %c0_i32 = arith.constant 0 : i32
    %c0_i32_0 = arith.constant 0 : i32
    return %arg0, %c0_i32, %arg1 : i32, i32, i32
  }
}

</mosaic_0001>

<llo_original>
// kernel: tpu_custom_call.1
$region0: #{tpu_custom_call.1}
  #allocation0 [shape = 'u32[]', space=smem, size = 0x4, offset = 0x4, fixed_abs, tag = 'smem constant byte address 0x4 - core index']
  #allocation1 [shape = 'u32[72,128]{1,0:T(1,128)}', space=vmem, size = 0x9000, scoped, tag = 'internal scratch']
  #allocation2 [shape = 'bf16[8,128]{1,0:T(8,128)(2,1)}', space=vmem, size = 0x800, scoped, tag = 'scratch operand']
  %s0 = inlined_call_operand.vmem [shape: f32[2,4], index: 0, kind: input, shape index: {}]
  %s1 = inlined_call_operand.hbm [shape: bf16[2,128,512], index: 1, kind: input, shape index: {}]
  %s2 = inlined_call_operand.hbm [shape: bf16[4,8,128], index: 2, kind: input, shape index: {}]
  %s3 = inlined_call_operand.vmem [shape: f32[8,1], index: 3, kind: input, shape index: {}]
  %s4 = inlined_call_operand.hbm [shape: f32[2,8,512], index: 4, kind: output, shape index: {}]
  %s5 = sld [smem:[#allocation0]]
  $region65: #{tpu_custom_call.1} parent=0
    _
  %s7 = ssub.s32 1, %s5
  %s8 = scalar_select 0, %s7, %s5
  $region1: #{tpu_custom_call.1} parent=0
    #allocation3 [shape = 'u8[1024]{0}', space=smem, size = 0x400, scoped, tag = 'input window, operand 0, single buffered']
    #allocation4 [shape = 's32[2]{0}', space=sflag, size = 0x8, scoped, tag = 'scoped memory for tpu_custom_call.1']
    #allocation5 [shape = 's32[2]{0}', space=sflag, size = 0x8, scoped, tag = 'scoped memory for tpu_custom_call.1']
    #allocation6 [shape = 's32[2]{0}', space=sflag, size = 0x8, scoped, tag = 'scoped memory for tpu_custom_call.1']
    #allocation7 [shape = 'u8[262144]{0}', space=vmem, size = 0x40000, scoped, tag = 'input window, operand 1']
    #allocation8 [shape = 'u8[8192]{0}', space=vmem, size = 0x2000, scoped, tag = 'input window, operand 2, single buffered']
    #allocation9 [shape = 's32[1]{0}', space=sflag, size = 0x4, scoped, tag = 'scoped memory for tpu_custom_call.1']
    #allocation10 [shape = 'u8[32768]{0}', space=vmem, size = 0x8000, scoped, tag = 'output window, operand 0']
    %9 = vsyncpa [#allocation6], 0
    %10 = vsyncpa [#allocation4], 0
    %s11 = scalar_lea.sflag [#allocation4], 1
    %12 = vsyncpa %s11, 0
    %13 = vsyncpa [#allocation9], 0
    %14 = vsyncpa [#allocation5], 0
    %s15 = scalar_lea.sflag [#allocation5], 1
    %16 = vsyncpa %s15, 0
    loop: start=0, step=1, limit=4
    $region2: #{tpu_custom_call.1} parent=1 // loop_pre_header
      _
    $region3: #{tpu_custom_call.1} parent=1 // loop_header
      %s18 = sphi 0, %s22
      %p19 = scmp.ge.s32.totalorder %s18, 4
      %s25 = sphi 0, %s37
      %s26 = sphi 0, %s33
      %s27 = sphi 0, %s25
      %s28 = sphi 0, %s26
      %s29 = sphi 0, %s27
      %s30 = sphi 0, %s28
      %s38 = sphi 0, %s38
      %s40 = sphi 0, %s38
      %s41 = sphi 0, %s40
      %s55 = sphi 0, %s41
      %s63 = sphi 0, %s65
      %s66 = sphi 0, %s63
      %s67 = sphi 0, %s66
      %s83 = sphi 0, %s67
      %s87 = sphi 0, %s87
      %s89 = sphi 0, %s87
      %s90 = sphi 0, %s89
      %s104 = sphi 0, %s90
      %s108 = sphi 0, %s108
      %s110 = sphi 0, %s108
      %s111 = sphi 0, %s110
      %s125 = sphi 0, %s111
      %s133 = sphi 0, %s135
      %s136 = sphi 0, %s133
      %s137 = sphi 0, %s136
      %s153 = sphi 0, %s137
    $region4: #{tpu_custom_call.1} parent=1 // loop_header_branch
      %21 = sbr.rel (%p19) target = $region8
    $region5: #{tpu_custom_call.1} parent=1 // loop_body
      %s23 = ssub.s32 %s18, 1
      %s24 = ssub.s32 %s18, 2
      %s31 = sadd.s32 1, %s26
      %p32 = scmp.ge.s32.totalorder %s31, 1
      %s33 = scalar_select %p32, 0, %s31
      %s34 = sadd.s32 1, %s25
      %s35 = scalar_select %p32, %s34, %s25
      %p36 = scmp.ge.s32.totalorder %s35, 2
      %s37 = scalar_select %p36, 0, %s35
      %s39 = sadd.s32 %s38, 1
      %p42 = scmp.eq.s32.totalorder %s18, 1
      %p43 = scmp.ne.s32.totalorder %s38, %s40
      %p44 = scmp.eq.s32.totalorder %s18, 0
      %p45 = por %p43, %p44
      %p46 = scmp.ne.s32.totalorder %s38, %s40
      %p47 = scmp.eq.s32.totalorder %s23, 1
      %p48 = por %p46, %p47
      %p49 = scmp.ne.s32.totalorder %s40, %s41
      %p50 = scmp.eq.s32.totalorder %s23, 0
      %p51 = por %p49, %p50
      %p52 = scmp.ne.s32.totalorder %s40, %s41
      %p53 = scmp.eq.s32.totalorder %s24, 1
      %p54 = por %p52, %p53
      %p56 = scmp.ne.s32.totalorder %s41, %s55
      %p57 = scmp.eq.s32.totalorder %s24, 0
      %p58 = por %p56, %p57
      %s59 = ssub.s32 %s25, %s37
      %s60 = ssub.s32 %s26, %s33
      %s61 = sor.u32 %s59, %s60
      %p62 = scmp.eq.s32.totalorder %s61, 0
      %s64 = sadd.s32 %s63, 1
      %s65 = scalar_select %p62, %s63, %s64
      %p68 = pneg %p62
      %p69 = scmp.eq.s32.totalorder %s18, 1
      %p70 = por %p68, %p69
      %p71 = scmp.ne.s32.totalorder %s63, %s66
      %p72 = scmp.eq.s32.totalorder %s18, 0
      %p73 = por %p71, %p72
      %p74 = scmp.ne.s32.totalorder %s63, %s66
      %p75 = scmp.eq.s32.totalorder %s23, 1
      %p76 = por %p74, %p75
      %p77 = scmp.ne.s32.totalorder %s66, %s67
      %p78 = scmp.eq.s32.totalorder %s23, 0
      %p79 = por %p77, %p78
      %p80 = scmp.ne.s32.totalorder %s66, %s67
      %p81 = scmp.eq.s32.totalorder %s24, 1
      %p82 = por %p80, %p81
      %p84 = scmp.ne.s32.totalorder %s67, %s83
      %p85 = scmp.eq.s32.totalorder %s24, 0
      %p86 = por %p84, %p85
      %s88 = sadd.s32 %s87, 1
      %p91 = scmp.eq.s32.totalorder %s18, 1
      %p92 = scmp.ne.s32.totalorder %s87, %s89
      %p93 = scmp.eq.s32.totalorder %s18, 0
      %p94 = por %p92, %p93
      %p95 = scmp.ne.s32.totalorder %s87, %s89
      %p96 = scmp.eq.s32.totalorder %s23, 1
      %p97 = por %p95, %p96
      %p98 = scmp.ne.s32.totalorder %s89, %s90
      %p99 = scmp.eq.s32.totalorder %s23, 0
      %p100 = por %p98, %p99
      %p101 = scmp.ne.s32.totalorder %s89, %s90
      %p102 = scmp.eq.s32.totalorder %s24, 1
      %p103 = por %p101, %p102
      %p105 = scmp.ne.s32.totalorder %s90, %s104
      %p106 = scmp.eq.s32.totalorder %s24, 0
      %p107 = por %p105, %p106
      %s109 = sadd.s32 %s108, 1
      %p112 = scmp.eq.s32.totalorder %s18, 1
      %p113 = scmp.ne.s32.totalorder %s108, %s110
      %p114 = scmp.eq.s32.totalorder %s18, 0
      %p115 = por %p113, %p114
      %p116 = scmp.ne.s32.totalorder %s108, %s110
      %p117 = scmp.eq.s32.totalorder %s23, 1
      %p118 = por %p116, %p117
      %p119 = scmp.ne.s32.totalorder %s110, %s111
      %p120 = scmp.eq.s32.totalorder %s23, 0
      %p121 = por %p119, %p120
      %p122 = scmp.ne.s32.totalorder %s110, %s111
      %p123 = scmp.eq.s32.totalorder %s24, 1
      %p124 = por %p122, %p123
      %p126 = scmp.ne.s32.totalorder %s111, %s125
      %p127 = scmp.eq.s32.totalorder %s24, 0
      %p128 = por %p126, %p127
      %s129 = ssub.s32 %s25, %s37
      %s130 = ssub.s32 %s26, %s33
      %s131 = sor.u32 %s129, %s130
      %p132 = scmp.eq.s32.totalorder %s131, 0
      %s134 = sadd.s32 %s133, 1
      %s135 = scalar_select %p132, %s133, %s134
      %p138 = pneg %p132
      %p139 = scmp.eq.s32.totalorder %s18, 1
      %p140 = por %p138, %p139
      %p141 = scmp.ne.s32.totalorder %s133, %s136
      %p142 = scmp.eq.s32.totalorder %s18, 0
      %p143 = por %p141, %p142
      %p144 = scmp.ne.s32.totalorder %s133, %s136
      %p145 = scmp.eq.s32.totalorder %s23, 1
      %p146 = por %p144, %p145
      %p147 = scmp.ne.s32.totalorder %s136, %s137
      %p148 = scmp.eq.s32.totalorder %s23, 0
      %p149 = por %p147, %p148
      %p150 = scmp.ne.s32.totalorder %s136, %s137
      %p151 = scmp.eq.s32.totalorder %s24, 1
      %p152 = por %p150, %p151
      %p154 = scmp.ne.s32.totalorder %s137, %s153
      %p155 = scmp.eq.s32.totalorder %s24, 0
      %p156 = por %p154, %p155
      %p157 = scmp.le.s32.totalorder 1, %s18
      %p158 = scmp.lt.s32.totalorder %s18, 3
      %p159 = pnand %p157, %p158
      %p160 = pneg %p159
      // Predicated region
      $region9: #{tpu_custom_call.1} parent=5 // pred_check
        _
      $region10: #{tpu_custom_call.1} parent=5 // pred_check_branch
        %162 = sbr.rel (%p159) target = $region12
      $region11: #{tpu_custom_call.1} parent=5 // pred_region
        %s163 = ssub.s32 %s18, 1
        // Predicated region
        $region13: #{tpu_custom_call.1} parent=11 // pred_check
          %p164 = pneg %p51
        $region14: #{tpu_custom_call.1} parent=11 // pred_check_branch
          %166 = sbr.rel (%p164) target = $region16
        $region15: #{tpu_custom_call.1} parent=11 // pred_region
          %168 = vsyncadd [#allocation6], 0
          %s170 = sshll.u32 %s0, 4
          %s171 = int_to_ptr.vmem [resolvable:$true] %s170
          %173 = dma.vmem_to_smem %s171, 32, [#allocation3], [#allocation6]
        $region16: #{tpu_custom_call.1} parent=11 // pred_fallthru
          _
        // Predicated region
        $region17: #{tpu_custom_call.1} parent=11 // pred_check
          %p174 = pneg %p100
        $region18: #{tpu_custom_call.1} parent=11 // pred_check_branch
          %176 = sbr.rel (%p174) target = $region20
        $region19: #{tpu_custom_call.1} parent=11 // pred_region
          %178 = vsyncadd [#allocation9], 0
          %s179 = sshll.u32 %s2, 4
          %s180 = int_to_ptr.hbm [resolvable:$true] %s179
          %s181 = sshll.u32 [#allocation8], 4
          %s182 = int_to_ptr.vmem [resolvable:$true] %s181
          %187 = dma.hbm_to_vmem [thread:$0]  %s180, 256, %s182, [#allocation9], 64, 64, 4
        $region20: #{tpu_custom_call.1} parent=11 // pred_fallthru
          _
        // Predicated region
        $region21: #{tpu_custom_call.1} parent=11 // pred_check
          %p188 = pneg %p121
        $region22: #{tpu_custom_call.1} parent=11 // pred_check_branch
          %190 = sbr.rel (%p188) target = $region24
        $region23: #{tpu_custom_call.1} parent=11 // pred_region
          _
        $region24: #{tpu_custom_call.1} parent=11 // pred_fallthru
          _
      $region12: #{tpu_custom_call.1} parent=5 // pred_fallthru
        _
      %p191 = scmp.lt.s32.totalorder %s18, 2
      // Predicated region
      $region25: #{tpu_custom_call.1} parent=5 // pred_check
        %p192 = pneg %p191
      $region26: #{tpu_custom_call.1} parent=5 // pred_check_branch
        %194 = sbr.rel (%p192) target = $region28
      $region27: #{tpu_custom_call.1} parent=5 // pred_region
        // Predicated region
        $region29: #{tpu_custom_call.1} parent=27 // pred_check
          %p195 = pneg %p73
        $region30: #{tpu_custom_call.1} parent=27 // pred_check_branch
          %197 = sbr.rel (%p195) target = $region32
        $region31: #{tpu_custom_call.1} parent=27 // pred_region
          %s198 = sand.u32 %s63, 1
          %s199 = scalar_lea.sflag [#allocation4], %s198
          %s200 = sand.u32 %s63, 1
          %s201 = smul.addr %s200, 256
          %s202 = scalar_lea.vmem [#allocation7], %s201
          %s203 = smul.u32 4, %s26
          %205 = vsyncadd %s199, 0
          %s206 = smul.addr %s25, 64
          %s207 = sadd.s32 %s203, %s206
          %s208 = smul.addr %s207, 4
          %s209 = scalar_lea.hbm %s1, %s208
          %s210 = sshll.u32 %s209, 4
          %s211 = int_to_ptr.hbm [resolvable:$true] %s210
          %s212 = sshll.u32 %s202, 4
          %s213 = int_to_ptr.vmem [resolvable:$true] %s212
          %218 = dma.hbm_to_vmem [thread:$0]  %s211, 4096, %s213, %s199, 256, 256, 16
        $region32: #{tpu_custom_call.1} parent=27 // pred_fallthru
          _
      $region28: #{tpu_custom_call.1} parent=5 // pred_fallthru
        _
      %p219 = scmp.le.s32.totalorder 1, %s18
      %p220 = scmp.lt.s32.totalorder %s18, 3
      %p221 = pnand %p219, %p220
      %p222 = pneg %p221
      // Predicated region
      $region33: #{tpu_custom_call.1} parent=5 // pred_check
        _
      $region34: #{tpu_custom_call.1} parent=5 // pred_check_branch
        %224 = sbr.rel (%p221) target = $region36
      $region35: #{tpu_custom_call.1} parent=5 // pred_region
        %s225 = ssub.s32 %s18, 1
        // Predicated region
        $region37: #{tpu_custom_call.1} parent=35 // pred_check
          %p226 = pneg %p51
        $region38: #{tpu_custom_call.1} parent=35 // pred_check_branch
          %228 = sbr.rel (%p226) target = $region40
        $region39: #{tpu_custom_call.1} parent=35 // pred_region
          %230 = dma.done [#allocation6], 32
        $region40: #{tpu_custom_call.1} parent=35 // pred_fallthru
          _
        %s231 = sand.u32 %s66, 1
        %s232 = scalar_lea.sflag [#allocation4], %s231
        %s233 = sand.u32 %s66, 1
        %s234 = smul.addr %s233, 256
        %s235 = scalar_lea.vmem [#allocation7], %s234
        // Predicated region
        $region41: #{tpu_custom_call.1} parent=35 // pred_check
          %p236 = pneg %p79
        $region42: #{tpu_custom_call.1} parent=35 // pred_check_branch
          %238 = sbr.rel (%p236) target = $region44
        $region43: #{tpu_custom_call.1} parent=35 // pred_region
          %240 = dma.done %s232, 4096
        $region44: #{tpu_custom_call.1} parent=35 // pred_fallthru
          _
        // Predicated region
        $region45: #{tpu_custom_call.1} parent=35 // pred_check
          %p241 = pneg %p100
        $region46: #{tpu_custom_call.1} parent=35 // pred_check_branch
          %243 = sbr.rel (%p241) target = $region48
        $region47: #{tpu_custom_call.1} parent=35 // pred_region
          %245 = dma.done [#allocation9], 256
        $region48: #{tpu_custom_call.1} parent=35 // pred_fallthru
          _
        %246 = sfence
        %p247 = pneg %p51
        %p248 = pneg %p48
        %s249 = sand.u32 %s66, 1
        %s250 = scalar_lea.sflag [#allocation4], %s249
        %s251 = sand.u32 %s66, 1
        %s252 = smul.addr %s251, 256
        %s253 = scalar_lea.vmem [#allocation7], %s252
        %p254 = pneg %p79
        %p255 = pneg %p76
        %p256 = pneg %p100
        %p257 = pneg %p97
        %p258 = pneg %p121
        %p259 = pneg %p118
        %p260 = pneg %p149
        %p261 = pneg %p146
        %s262 = sand.u32 %s136, 1
        %s263 = scalar_lea.sflag [#allocation5], %s262
        %s264 = sand.u32 %s136, 1
        %s265 = smul.addr %s264, 32
        %s266 = scalar_lea.vmem [#allocation10], %s265
        %s267 = smul.u32 4, %s28
        %s268 = smul.u32 4, %s28
        %p269 = scmp.eq.s32.totalorder %s28, 0
        // Predicated region
        $region49: #{tpu_custom_call.1} parent=35 // pred_check
          %p270 = pneg %p269
        $region50: #{tpu_custom_call.1} parent=35 // pred_check_branch
          %272 = sbr.rel (%p270) target = $region52
        $region51: #{tpu_custom_call.1} parent=35 // pred_region
          %s273 = smul.u32 %s27, 128
          %s274 = sld [smem:[#allocation3 + %s273]]
          %v275 = vld [vmem:[#allocation8] sm:$0xf]
          %v276 = vunpack.c.l.bf16 %v275
          %v277 = vstv %s274
          %v278 = vmul.f32 %v277, %v276
          %s279 = sadd.s32 %s273, 1
          %s280 = sld [smem:[#allocation3 + %s279]]
          %s281 = scalar_lea.vmem [#allocation8], 4
          %v282 = vld [vmem:[%s281] sm:$0xf]
          %v283 = vunpack.c.l.bf16 %v282
          %v284 = vstv %s280
          %v285 = vmul.f32 %v284, %v283
          %v286 = vadd.f32 %v278, %v285
          %s287 = sadd.s32 %s273, 2
          %s288 = sld [smem:[#allocation3 + %s287]]
          %s289 = scalar_lea.vmem [#allocation8], 8
          %v290 = vld [vmem:[%s289] sm:$0xf]
          %v291 = vunpack.c.l.bf16 %v290
          %v292 = vstv %s288
          %v293 = vmul.f32 %v292, %v291
          %v294 = vadd.f32 %v286, %v293
          %s295 = sadd.s32 %s273, 3
          %s296 = sld [smem:[#allocation3 + %s295]]
          %s297 = scalar_lea.vmem [#allocation8], 12
          %v298 = vld [vmem:[%s297] sm:$0xf]
          %v299 = vunpack.c.l.bf16 %v298
          %v300 = vstv %s296
          %v301 = vmul.f32 %v300, %v299
          %v302 = vadd.f32 %v294, %v301
          %v303 = vpack.c.bf16 %v302, %v302
          %304 = vst [vmem:[#allocation2] sm:$0xf] %v303
        $region52: #{tpu_custom_call.1} parent=35 // pred_fallthru
          _
        %v305 = vld [vmem:[#allocation2] sm:$0xf]
        %v306 = vld [vmem:[%s235] sm:$0xff]
        %v307 = vld [vmem:[%s235 + $0x8] sm:$0xff]
        %v308 = vld [vmem:[%s235 + $0x10] sm:$0xff]
        %v309 = vld [vmem:[%s235 + $0x18] sm:$0xff]
        %v310 = vld [vmem:[%s235 + $0x20] sm:$0xff]
        %v311 = vld [vmem:[%s235 + $0x28] sm:$0xff]
        %v312 = vld [vmem:[%s235 + $0x30] sm:$0xff]
        %v313 = vld [vmem:[%s235 + $0x38] sm:$0xff]
        %v314 = vld [vmem:[%s235 + $0x40] sm:$0xff]
        %v315 = vld [vmem:[%s235 + $0x48] sm:$0xff]
        %v316 = vld [vmem:[%s235 + $0x50] sm:$0xff]
        %v317 = vld [vmem:[%s235 + $0x58] sm:$0xff]
        %v318 = vld [vmem:[%s235 + $0x60] sm:$0xff]
        %v319 = vld [vmem:[%s235 + $0x68] sm:$0xff]
        %v320 = vld [vmem:[%s235 + $0x70] sm:$0xff]
        %v321 = vld [vmem:[%s235 + $0x78] sm:$0xff]
        %v322 = vld [vmem:[%s235 + $0x80] sm:$0xff]
        %v323 = vld [vmem:[%s235 + $0x88] sm:$0xff]
        %v324 = vld [vmem:[%s235 + $0x90] sm:$0xff]
        %v325 = vld [vmem:[%s235 + $0x98] sm:$0xff]
        %v326 = vld [vmem:[%s235 + $0xa0] sm:$0xff]
        %v327 = vld [vmem:[%s235 + $0xa8] sm:$0xff]
        %v328 = vld [vmem:[%s235 + $0xb0] sm:$0xff]
        %v329 = vld [vmem:[%s235 + $0xb8] sm:$0xff]
        %v330 = vld [vmem:[%s235 + $0xc0] sm:$0xff]
        %v331 = vld [vmem:[%s235 + $0xc8] sm:$0xff]
        %v332 = vld [vmem:[%s235 + $0xd0] sm:$0xff]
        %v333 = vld [vmem:[%s235 + $0xd8] sm:$0xff]
        %v334 = vld [vmem:[%s235 + $0xe0] sm:$0xff]
        %v335 = vld [vmem:[%s235 + $0xe8] sm:$0xff]
        %v336 = vld [vmem:[%s235 + $0xf0] sm:$0xff]
        %v337 = vld [vmem:[%s235 + $0xf8] sm:$0xff]
        %v338 = vld [vmem:[%s3] sm:$0xff]
        %340 = vset.pattern.permute.xlu0 0
        %341 = vperm.xlu0 %340, %v338
        %v342 = vpop.permute.xlu0 %341
        %v376 = vunpack.c.l.b16 %v306
        %v377 = vunpack.c.h.b16 %v306
        %v378 = vunpack.c.l.b16 %v307
        %v379 = vunpack.c.h.b16 %v307
        %v380 = vunpack.c.l.b16 %v308
        %v381 = vunpack.c.h.b16 %v308
        %v382 = vunpack.c.l.b16 %v309
        %v383 = vunpack.c.h.b16 %v309
        %v384 = vunpack.c.l.b16 %v310
        %v385 = vunpack.c.h.b16 %v310
        %v386 = vunpack.c.l.b16 %v311
        %v387 = vunpack.c.h.b16 %v311
        %v388 = vunpack.c.l.b16 %v312
        %v389 = vunpack.c.h.b16 %v312
        %v390 = vunpack.c.l.b16 %v313
        %v391 = vunpack.c.h.b16 %v313
        %v392 = vunpack.c.l.b16 %v314
        %v393 = vunpack.c.h.b16 %v314
        %v394 = vunpack.c.l.b16 %v315
        %v395 = vunpack.c.h.b16 %v315
        %v396 = vunpack.c.l.b16 %v316
        %v397 = vunpack.c.h.b16 %v316
        %v398 = vunpack.c.l.b16 %v317
        %v399 = vunpack.c.h.b16 %v317
        %v400 = vunpack.c.l.b16 %v318
        %v401 = vunpack.c.h.b16 %v318
        %v402 = vunpack.c.l.b16 %v319
        %v403 = vunpack.c.h.b16 %v319
        %v404 = vunpack.c.l.b16 %v320
        %v405 = vunpack.c.h.b16 %v320
        %v406 = vunpack.c.l.b16 %v321
        %v407 = vunpack.c.h.b16 %v321
        %v408 = vunpack.c.l.b16 %v322
        %v409 = vunpack.c.h.b16 %v322
        %v410 = vunpack.c.l.b16 %v323
        %v411 = vunpack.c.h.b16 %v323
        %v412 = vunpack.c.l.b16 %v324
        %v413 = vunpack.c.h.b16 %v324
        %v414 = vunpack.c.l.b16 %v325
        %v415 = vunpack.c.h.b16 %v325
        %v416 = vunpack.c.l.b16 %v326
        %v417 = vunpack.c.h.b16 %v326
        %v418 = vunpack.c.l.b16 %v327
        %v419 = vunpack.c.h.b16 %v327
        %v420 = vunpack.c.l.b16 %v328
        %v421 = vunpack.c.h.b16 %v328
        %v422 = vunpack.c.l.b16 %v329
        %v423 = vunpack.c.h.b16 %v329
        %v424 = vunpack.c.l.b16 %v330
        %v425 = vunpack.c.h.b16 %v330
        %v426 = vunpack.c.l.b16 %v331
        %v427 = vunpack.c.h.b16 %v331
        %v428 = vunpack.c.l.b16 %v332
        %v429 = vunpack.c.h.b16 %v332
        %v430 = vunpack.c.l.b16 %v333
        %v431 = vunpack.c.h.b16 %v333
        %v432 = vunpack.c.l.b16 %v334
        %v433 = vunpack.c.h.b16 %v334
        %v434 = vunpack.c.l.b16 %v335
        %v435 = vunpack.c.h.b16 %v335
        %v436 = vunpack.c.l.b16 %v336
        %v437 = vunpack.c.h.b16 %v336
        %v438 = vunpack.c.l.b16 %v337
        %v439 = vunpack.c.h.b16 %v337
        %v440 = vpack.c.b16 %v380, %v376
        %v441 = vpack.c.b16 %v381, %v377
        %v442 = vpack.c.b16 %v382, %v378
        %v443 = vpack.c.b16 %v383, %v379
        %v444 = vpack.c.b16 %v388, %v384
        %v445 = vpack.c.b16 %v389, %v385
        %v446 = vpack.c.b16 %v390, %v386
        %v447 = vpack.c.b16 %v391, %v387
        %v448 = vpack.c.b16 %v396, %v392
        %v449 = vpack.c.b16 %v397, %v393
        %v450 = vpack.c.b16 %v398, %v394
        %v451 = vpack.c.b16 %v399, %v395
        %v452 = vpack.c.b16 %v404, %v400
        %v453 = vpack.c.b16 %v405, %v401
        %v454 = vpack.c.b16 %v406, %v402
        %v455 = vpack.c.b16 %v407, %v403
        %v456 = vpack.c.b16 %v412, %v408
        %v457 = vpack.c.b16 %v413, %v409
        %v458 = vpack.c.b16 %v414, %v410
        %v459 = vpack.c.b16 %v415, %v411
        %v460 = vpack.c.b16 %v420, %v416
        %v461 = vpack.c.b16 %v421, %v417
        %v462 = vpack.c.b16 %v422, %v418
        %v463 = vpack.c.b16 %v423, %v419
        %v464 = vpack.c.b16 %v428, %v424
        %v465 = vpack.c.b16 %v429, %v425
        %v466 = vpack.c.b16 %v430, %v426
        %v467 = vpack.c.b16 %v431, %v427
        %v468 = vpack.c.b16 %v436, %v432
        %v469 = vpack.c.b16 %v437, %v433
        %v470 = vpack.c.b16 %v438, %v434
        %v471 = vpack.c.b16 %v439, %v435
        %504 = vmatpush.bf16.msra.mxu0 %v468
        %505 = vmatpush.bf16.msra.mxu0 %v464
        %506 = vmatpush.bf16.msra.mxu0 %v460
        %507 = vmatpush.bf16.msra.mxu0 %v456
        %508 = vmatpush.bf16.msra.mxu0 %v452
        %509 = vmatpush.bf16.msra.mxu0 %v448
        %510 = vmatpush.bf16.msra.mxu0 %v444
        %511 = vmatpush.bf16.msra.mxu0 %v440
        %512 = vmatmul.bf16.gmra.mxu0 %v305
        %v513 = vpop.f32.mrf.mxu0
        %v514 = vadd.f32 %v342, %v513
        %v515 = vpop.f32.mrf.mxu0
        %516 = vdwg.mxu0
        %517 = vmatpush.bf16.msra.mxu0 %v469
        %518 = vmatpush.bf16.msra.mxu0 %v465
        %519 = vmatpush.bf16.msra.mxu0 %v461
        %520 = vmatpush.bf16.msra.mxu0 %v457
        %521 = vmatpush.bf16.msra.mxu0 %v453
        %522 = vmatpush.bf16.msra.mxu0 %v449
        %523 = vmatpush.bf16.msra.mxu0 %v445
        %524 = vmatpush.bf16.msra.mxu0 %v441
        %525 = vmatmul.bf16.gmra.mxu0 %v305
        %v526 = vpop.f32.mrf.mxu0
        %v527 = vadd.f32 %v342, %v526
        %v528 = vpop.f32.mrf.mxu0
        %529 = vdwg.mxu0
        %530 = vmatpush.bf16.msra.mxu0 %v470
        %531 = vmatpush.bf16.msra.mxu0 %v466
        %532 = vmatpush.bf16.msra.mxu0 %v462
        %533 = vmatpush.bf16.msra.mxu0 %v458
        %534 = vmatpush.bf16.msra.mxu0 %v454
        %535 = vmatpush.bf16.msra.mxu0 %v450
        %536 = vmatpush.bf16.msra.mxu0 %v446
        %537 = vmatpush.bf16.msra.mxu0 %v442
        %538 = vmatmul.bf16.gmra.mxu0 %v305
        %v539 = vpop.f32.mrf.mxu0
        %v540 = vadd.f32 %v342, %v539
        %v541 = vpop.f32.mrf.mxu0
        %542 = vdwg.mxu0
        %543 = vmatpush.bf16.msra.mxu0 %v471
        %544 = vmatpush.bf16.msra.mxu0 %v467
        %545 = vmatpush.bf16.msra.mxu0 %v463
        %546 = vmatpush.bf16.msra.mxu0 %v459
        %547 = vmatpush.bf16.msra.mxu0 %v455
        %548 = vmatpush.bf16.msra.mxu0 %v451
        %549 = vmatpush.bf16.msra.mxu0 %v447
        %550 = vmatpush.bf16.msra.mxu0 %v443
        %551 = vmatmul.bf16.gmra.mxu0 %v305
        %v552 = vpop.f32.mrf.mxu0
        %v553 = vadd.f32 %v342, %v552
        %v554 = vpop.f32.mrf.mxu0
        %555 = vdwg.mxu0
        %556 = vst [vmem:[%s266] sm:$0xff] %v514
        %557 = vst [vmem:[%s266 + $0x8] sm:$0xff] %v527
        %558 = vst [vmem:[%s266 + $0x10] sm:$0xff] %v540
        %559 = vst [vmem:[%s266 + $0x18] sm:$0xff] %v553
        %s560 = sand.u32 %s136, 1
        %s561 = scalar_lea.sflag [#allocation5], %s560
        %s562 = sand.u32 %s136, 1
        %s563 = smul.addr %s562, 32
        %s564 = scalar_lea.vmem [#allocation10], %s563
        // Predicated region
        $region53: #{tpu_custom_call.1} parent=35 // pred_check
          %p565 = pneg %p146
        $region54: #{tpu_custom_call.1} parent=35 // pred_check_branch
          %567 = sbr.rel (%p565) target = $region56
        $region55: #{tpu_custom_call.1} parent=35 // pred_region
          %s568 = smul.u32 4, %s28
          %570 = vsyncadd %s561, 0
          %s571 = smul.addr %s27, 4
          %s572 = sadd.s32 %s568, %s571
          %s573 = smul.addr %s572, 8
          %s574 = scalar_lea.hbm %s4, %s573
          %s576 = sshll.u32 %s564, 4
          %s577 = int_to_ptr.vmem [resolvable:$true] %s576
          %s578 = sshll.u32 %s574, 4
          %s579 = int_to_ptr.hbm [resolvable:$true] %s578
          %581 = dma.vmem_to_hbm [thread:$0]  %s577, 512, %s579, %s561
        $region56: #{tpu_custom_call.1} parent=35 // pred_fallthru
          _
      $region36: #{tpu_custom_call.1} parent=5 // pred_fallthru
        _
      %p582 = scmp.le.s32.totalorder 2, %s18
      // Predicated region
      $region57: #{tpu_custom_call.1} parent=5 // pred_check
        %p583 = pneg %p582
      $region58: #{tpu_custom_call.1} parent=5 // pred_check_branch
        %585 = sbr.rel (%p583) target = $region60
      $region59: #{tpu_custom_call.1} parent=5 // pred_region
        %s586 = ssub.s32 %s18, 2
        // Predicated region
        $region61: #{tpu_custom_call.1} parent=59 // pred_check
          %p587 = pneg %p152
        $region62: #{tpu_custom_call.1} parent=59 // pred_check_branch
          %589 = sbr.rel (%p587) target = $region64
        $region63: #{tpu_custom_call.1} parent=59 // pred_region
          %s590 = sand.u32 %s137, 1
          %s591 = scalar_lea.sflag [#allocation5], %s590
          %s592 = sand.u32 %s137, 1
          %s593 = smul.addr %s592, 32
          %s594 = scalar_lea.vmem [#allocation10], %s593
          %596 = dma.done %s591, 512
        $region64: #{tpu_custom_call.1} parent=59 // pred_fallthru
          _
      $region60: #{tpu_custom_call.1} parent=5 // pred_fallthru
        _
    $region6: #{tpu_custom_call.1} parent=1 // loop_footer
      %s22 = sadd.s32 1, %s18
    $region7: #{tpu_custom_call.1} parent=1 // loop_footer_branch
      %17 = sbr.rel target = $region3
    $region8: #{tpu_custom_call.1} parent=1 // loop_exit
      _
    %597 = vsyncpa [#allocation4], 1
    %s598 = scalar_lea.sflag [#allocation4], 1
    %599 = vsyncpa %s598, 1
    %600 = vsyncpa [#allocation9], 1
    %601 = vsyncpa [#allocation5], 1
    %s602 = scalar_lea.sflag [#allocation5], 1
    %603 = vsyncpa %s602, 1
    %604 = vsyncpa [#allocation6], 1
    %s605 = scalar_lea.sflag [#allocation6], 1
    %606 = vsyncpa %s605, 1

// kernel: tpu_custom_call.1
$region0: #{tpu_custom_call.1}
  #allocation0 [shape = 'u32[]', space=smem, size = 0x4, offset = 0x4, fixed_abs, tag = 'smem constant byte address 0x4 - core index']
  #allocation1 [shape = 'u32[72,128]{1,0:T(1,128)}', space=vmem, size = 0x9000, scoped, tag = 'internal scratch']
  #allocation2 [shape = 'bf16[8,128]{1,0:T(8,128)(2,1)}', space=vmem, size = 0x800, scoped, tag = 'scratch operand']
  %s0 = inlined_call_operand.vmem [shape: f32[2,4], index: 0, kind: input, shape index: {}]
  %s1 = inlined_call_operand.hbm [shape: bf16[2,128,512], index: 1, kind: input, shape index: {}]
  %s2 = inlined_call_operand.hbm [shape: bf16[4,8,128], index: 2, kind: input, shape index: {}]
  %s3 = inlined_call_operand.vmem [shape: f32[8,1], index: 3, kind: input, shape index: {}]
  %s4 = inlined_call_operand.hbm [shape: f32[2,8,512], index: 4, kind: output, shape index: {}]
  %s5 = sld [smem:[#allocation0]]
  $region65: #{tpu_custom_call.1} parent=0
    _
  %s7 = ssub.s32 1, %s5
  %s8 = scalar_select 0, %s7, %s5
  $region1: #{tpu_custom_call.1} parent=0
    #allocation3 [shape = 'u8[1024]{0}', space=smem, size = 0x400, scoped, tag = 'input window, operand 0, single buffered']
    #allocation4 [shape = 's32[2]{0}', space=sflag, size = 0x8, scoped, tag = 'scoped memory for tpu_custom_call.1']
    #allocation5 [shape = 's32[2]{0}', space=sflag, size = 0x8, scoped, tag = 'scoped memory for tpu_custom_call.1']
    #allocation6 [shape = 's32[2]{0}', space=sflag, size = 0x8, scoped, tag = 'scoped memory for tpu_custom_call.1']
    #allocation7 [shape = 'u8[262144]{0}', space=vmem, size = 0x40000, scoped, tag = 'input window, operand 1']
    #allocation8 [shape = 'u8[8192]{0}', space=vmem, size = 0x2000, scoped, tag = 'input window, operand 2, single buffered']
    #allocation9 [shape = 's32[1]{0}', space=sflag, size = 0x4, scoped, tag = 'scoped memory for tpu_custom_call.1']
    #allocation10 [shape = 'u8[32768]{0}', space=vmem, size = 0x8000, scoped, tag = 'output window, operand 0']
    %9 = vsyncpa [#allocation6], 0
    %10 = vsyncpa [#allocation4], 0
    %s11 = scalar_lea.sflag [#allocation4], 1
    %12 = vsyncpa %s11, 0
    %13 = vsyncpa [#allocation9], 0
    %14 = vsyncpa [#allocation5], 0
    %s15 = scalar_lea.sflag [#allocation5], 1
    %16 = vsyncpa %s15, 0
    loop: start=0, step=1, limit=4
    $region2: #{tpu_custom_call.1} parent=1 // loop_pre_header
      _
    $region3: #{tpu_custom_call.1} parent=1 // loop_header
      %s18 = sphi 0, %s22
      %p19 = scmp.ge.s32.totalorder %s18, 4
      %s25 = sphi 0, %s37
      %s26 = sphi 0, %s33
      %s27 = sphi 0, %s25
      %s28 = sphi 0, %s26
      %s29 = sphi 0, %s27
      %s30 = sphi 0, %s28
      %s38 = sphi 0, %s38
      %s40 = sphi 0, %s38
      %s41 = sphi 0, %s40
      %s55 = sphi 0, %s41
      %s63 = sphi 0, %s65
      %s66 = sphi 0, %s63
      %s67 = sphi 0, %s66
      %s83 = sphi 0, %s67
      %s87 = sphi 0, %s87
      %s89 = sphi 0, %s87
      %s90 = sphi 0, %s89
      %s104 = sphi 0, %s90
      %s108 = sphi 0, %s108
      %s110 = sphi 0, %s108
      %s111 = sphi 0, %s110
      %s125 = sphi 0, %s111
      %s133 = sphi 0, %s135
      %s136 = sphi 0, %s133
      %s137 = sphi 0, %s136
      %s153 = sphi 0, %s137
    $region4: #{tpu_custom_call.1} parent=1 // loop_header_branch
      %21 = sbr.rel (%p19) target = $region8
    $region5: #{tpu_custom_call.1} parent=1 // loop_body
      %s23 = ssub.s32 %s18, 1
      %s24 = ssub.s32 %s18, 2
      %s31 = sadd.s32 1, %s26
      %p32 = scmp.ge.s32.totalorder %s31, 1
      %s33 = scalar_select %p32, 0, %s31
      %s34 = sadd.s32 1, %s25
      %s35 = scalar_select %p32, %s34, %s25
      %p36 = scmp.ge.s32.totalorder %s35, 2
      %s37 = scalar_select %p36, 0, %s35
      %s39 = sadd.s32 %s38, 1
      %p42 = scmp.eq.s32.totalorder %s18, 1
      %p43 = scmp.ne.s32.totalorder %s38, %s40
      %p44 = scmp.eq.s32.totalorder %s18, 0
      %p45 = por %p43, %p44
      %p46 = scmp.ne.s32.totalorder %s38, %s40
      %p47 = scmp.eq.s32.totalorder %s23, 1
      %p48 = por %p46, %p47
      %p49 = scmp.ne.s32.totalorder %s40, %s41
      %p50 = scmp.eq.s32.totalorder %s23, 0
      %p51 = por %p49, %p50
      %p52 = scmp.ne.s32.totalorder %s40, %s41
      %p53 = scmp.eq.s32.totalorder %s24, 1
      %p54 = por %p52, %p53
      %p56 = scmp.ne.s32.totalorder %s41, %s55
      %p57 = scmp.eq.s32.totalorder %s24, 0
      %p58 = por %p56, %p57
      %s59 = ssub.s32 %s25, %s37
      %s60 = ssub.s32 %s26, %s33
      %s61 = sor.u32 %s59, %s60
      %p62 = scmp.eq.s32.totalorder %s61, 0
      %s64 = sadd.s32 %s63, 1
      %s65 = scalar_select %p62, %s63, %s64
      %p68 = pneg %p62
      %p69 = scmp.eq.s32.totalorder %s18, 1
      %p70 = por %p68, %p69
      %p71 = scmp.ne.s32.totalorder %s63, %s66
      %p72 = scmp.eq.s32.totalorder %s18, 0
      %p73 = por %p71, %p72
      %p74 = scmp.ne.s32.totalorder %s63, %s66
      %p75 = scmp.eq.s32.totalorder %s23, 1
      %p76 = por %p74, %p75
      %p77 = scmp.ne.s32.totalorder %s66, %s67
      %p78 = scmp.eq.s32.totalorder %s23, 0
      %p79 = por %p77, %p78
      %p80 = scmp.ne.s32.totalorder %s66, %s67
      %p81 = scmp.eq.s32.totalorder %s24, 1
      %p82 = por %p80, %p81
      %p84 = scmp.ne.s32.totalorder %s67, %s83
      %p85 = scmp.eq.s32.totalorder %s24, 0
      %p86 = por %p84, %p85
      %s88 = sadd.s32 %s87, 1
      %p91 = scmp.eq.s32.totalorder %s18, 1
      %p92 = scmp.ne.s32.totalorder %s87, %s89
      %p93 = scmp.eq.s32.totalorder %s18, 0
      %p94 = por %p92, %p93
      %p95 = scmp.ne.s32.totalorder %s87, %s89
      %p96 = scmp.eq.s32.totalorder %s23, 1
      %p97 = por %p95, %p96
      %p98 = scmp.ne.s32.totalorder %s89, %s90
      %p99 = scmp.eq.s32.totalorder %s23, 0
      %p100 = por %p98, %p99
      %p101 = scmp.ne.s32.totalorder %s89, %s90
      %p102 = scmp.eq.s32.totalorder %s24, 1
      %p103 = por %p101, %p102
      %p105 = scmp.ne.s32.totalorder %s90, %s104
      %p106 = scmp.eq.s32.totalorder %s24, 0
      %p107 = por %p105, %p106
      %s109 = sadd.s32 %s108, 1
      %p112 = scmp.eq.s32.totalorder %s18, 1
      %p113 = scmp.ne.s32.totalorder %s108, %s110
      %p114 = scmp.eq.s32.totalorder %s18, 0
      %p115 = por %p113, %p114
      %p116 = scmp.ne.s32.totalorder %s108, %s110
      %p117 = scmp.eq.s32.totalorder %s23, 1
      %p118 = por %p116, %p117
      %p119 = scmp.ne.s32.totalorder %s110, %s111
      %p120 = scmp.eq.s32.totalorder %s23, 0
      %p121 = por %p119, %p120
      %p122 = scmp.ne.s32.totalorder %s110, %s111
      %p123 = scmp.eq.s32.totalorder %s24, 1
      %p124 = por %p122, %p123
      %p126 = scmp.ne.s32.totalorder %s111, %s125
      %p127 = scmp.eq.s32.totalorder %s24, 0
      %p128 = por %p126, %p127
      %s129 = ssub.s32 %s25, %s37
      %s130 = ssub.s32 %s26, %s33
      %s131 = sor.u32 %s129, %s130
      %p132 = scmp.eq.s32.totalorder %s131, 0
      %s134 = sadd.s32 %s133, 1
      %s135 = scalar_select %p132, %s133, %s134
      %p138 = pneg %p132
      %p139 = scmp.eq.s32.totalorder %s18, 1
      %p140 = por %p138, %p139
      %p141 = scmp.ne.s32.totalorder %s133, %s136
      %p142 = scmp.eq.s32.totalorder %s18, 0
      %p143 = por %p141, %p142
      %p144 = scmp.ne.s32.totalorder %s133, %s136
      %p145 = scmp.eq.s32.totalorder %s23, 1
      %p146 = por %p144, %p145
      %p147 = scmp.ne.s32.totalorder %s136, %s137
      %p148 = scmp.eq.s32.totalorder %s23, 0
      %p149 = por %p147, %p148
      %p150 = scmp.ne.s32.totalorder %s136, %s137
      %p151 = scmp.eq.s32.totalorder %s24, 1
      %p152 = por %p150, %p151
      %p154 = scmp.ne.s32.totalorder %s137, %s153
      %p155 = scmp.eq.s32.totalorder %s24, 0
      %p156 = por %p154, %p155
      %p157 = scmp.le.s32.totalorder 1, %s18
      %p158 = scmp.lt.s32.totalorder %s18, 3
      %p159 = pnand %p157, %p158
      %p160 = pneg %p159
      // Predicated region
      $region9: #{tpu_custom_call.1} parent=5 // pred_check
        _
      $region10: #{tpu_custom_call.1} parent=5 // pred_check_branch
        %162 = sbr.rel (%p159) target = $region12
      $region11: #{tpu_custom_call.1} parent=5 // pred_region
        %s163 = ssub.s32 %s18, 1
        // Predicated region
        $region13: #{tpu_custom_call.1} parent=11 // pred_check
          %p164 = pneg %p51
        $region14: #{tpu_custom_call.1} parent=11 // pred_check_branch
          %166 = sbr.rel (%p164) target = $region16
        $region15: #{tpu_custom_call.1} parent=11 // pred_region
          %168 = vsyncadd [#allocation6], 0
          %s170 = sshll.u32 %s0, 4
          %s171 = int_to_ptr.vmem [resolvable:$true] %s170
          %173 = dma.vmem_to_smem %s171, 32, [#allocation3], [#allocation6]
        $region16: #{tpu_custom_call.1} parent=11 // pred_fallthru
          _
        // Predicated region
        $region17: #{tpu_custom_call.1} parent=11 // pred_check
          %p174 = pneg %p100
        $region18: #{tpu_custom_call.1} parent=11 // pred_check_branch
          %176 = sbr.rel (%p174) target = $region20
        $region19: #{tpu_custom_call.1} parent=11 // pred_region
          %178 = vsyncadd [#allocation9], 0
          %s179 = sshll.u32 %s2, 4
          %s180 = int_to_ptr.hbm [resolvable:$true] %s179
          %s181 = sshll.u32 [#allocation8], 4
          %s182 = int_to_ptr.vmem [resolvable:$true] %s181
          %187 = dma.hbm_to_vmem [thread:$0]  %s180, 256, %s182, [#allocation9], 64, 64, 4
        $region20: #{tpu_custom_call.1} parent=11 // pred_fallthru
          _
        // Predicated region
        $region21: #{tpu_custom_call.1} parent=11 // pred_check
          %p188 = pneg %p121
        $region22: #{tpu_custom_call.1} parent=11 // pred_check_branch
          %190 = sbr.rel (%p188) target = $region24
        $region23: #{tpu_custom_call.1} parent=11 // pred_region
          _
        $region24: #{tpu_custom_call.1} parent=11 // pred_fallthru
          _
      $region12: #{tpu_custom_call.1} parent=5 // pred_fallthru
        _
      %p191 = scmp.lt.s32.totalorder %s18, 2
      // Predicated region
      $region25: #{tpu_custom_call.1} parent=5 // pred_check
        %p192 = pneg %p191
      $region26: #{tpu_custom_call.1} parent=5 // pred_check_branch
        %194 = sbr.rel (%p192) target = $region28
      $region27: #{tpu_custom_call.1} parent=5 // pred_region
        // Predicated region
        $region29: #{tpu_custom_call.1} parent=27 // pred_check
          %p195 = pneg %p73
        $region30: #{tpu_custom_call.1} parent=27 // pred_check_branch
          %197 = sbr.rel (%p195) target = $region32
        $region31: #{tpu_custom_call.1} parent=27 // pred_region
          %s198 = sand.u32 %s63, 1
          %s199 = scalar_lea.sflag [#allocation4], %s198
          %s200 = sand.u32 %s63, 1
          %s201 = smul.addr %s200, 256
          %s202 = scalar_lea.vmem [#allocation7], %s201
          %s203 = smul.u32 4, %s26
          %205 = vsyncadd %s199, 0
          %s206 = smul.addr %s25, 64
          %s207 = sadd.s32 %s203, %s206
          %s208 = smul.addr %s207, 4
          %s209 = scalar_lea.hbm %s1, %s208
          %s210 = sshll.u32 %s209, 4
          %s211 = int_to_ptr.hbm [resolvable:$true] %s210
          %s212 = sshll.u32 %s202, 4
          %s213 = int_to_ptr.vmem [resolvable:$true] %s212
          %218 = dma.hbm_to_vmem [thread:$0]  %s211, 4096, %s213, %s199, 256, 256, 16
        $region32: #{tpu_custom_call.1} parent=27 // pred_fallthru
          _
      $region28: #{tpu_custom_call.1} parent=5 // pred_fallthru
        _
      %p219 = scmp.le.s32.totalorder 1, %s18
      %p220 = scmp.lt.s32.totalorder %s18, 3
      %p221 = pnand %p219, %p220
      %p222 = pneg %p221
      // Predicated region
      $region33: #{tpu_custom_call.1} parent=5 // pred_check
        _
      $region34: #{tpu_custom_call.1} parent=5 // pred_check_branch
        %224 = sbr.rel (%p221) target = $region36
      $region35: #{tpu_custom_call.1} parent=5 // pred_region
        %s225 = ssub.s32 %s18, 1
        // Predicated region
        $region37: #{tpu_custom_call.1} parent=35 // pred_check
          %p226 = pneg %p51
        $region38: #{tpu_custom_call.1} parent=35 // pred_check_branch
          %228 = sbr.rel (%p226) target = $region40
        $region39: #{tpu_custom_call.1} parent=35 // pred_region
          %230 = dma.done [#allocation6], 32
        $region40: #{tpu_custom_call.1} parent=35 // pred_fallthru
          _
        %s231 = sand.u32 %s66, 1
        %s232 = scalar_lea.sflag [#allocation4], %s231
        %s233 = sand.u32 %s66, 1
        %s234 = smul.addr %s233, 256
        %s235 = scalar_lea.vmem [#allocation7], %s234
        // Predicated region
        $region41: #{tpu_custom_call.1} parent=35 // pred_check
          %p236 = pneg %p79
        $region42: #{tpu_custom_call.1} parent=35 // pred_check_branch
          %238 = sbr.rel (%p236) target = $region44
        $region43: #{tpu_custom_call.1} parent=35 // pred_region
          %240 = dma.done %s232, 4096
        $region44: #{tpu_custom_call.1} parent=35 // pred_fallthru
          _
        // Predicated region
        $region45: #{tpu_custom_call.1} parent=35 // pred_check
          %p241 = pneg %p100
        $region46: #{tpu_custom_call.1} parent=35 // pred_check_branch
          %243 = sbr.rel (%p241) target = $region48
        $region47: #{tpu_custom_call.1} parent=35 // pred_region
          %245 = dma.done [#allocation9], 256
        $region48: #{tpu_custom_call.1} parent=35 // pred_fallthru
          _
        %246 = sfence
        %p247 = pneg %p51
        %p248 = pneg %p48
        %s249 = sand.u32 %s66, 1
        %s250 = scalar_lea.sflag [#allocation4], %s249
        %s251 = sand.u32 %s66, 1
        %s252 = smul.addr %s251, 256
        %s253 = scalar_lea.vmem [#allocation7], %s252
        %p254 = pneg %p79
        %p255 = pneg %p76
        %p256 = pneg %p100
        %p257 = pneg %p97
        %p258 = pneg %p121
        %p259 = pneg %p118
        %p260 = pneg %p149
        %p261 = pneg %p146
        %s262 = sand.u32 %s136, 1
        %s263 = scalar_lea.sflag [#allocation5], %s262
        %s264 = sand.u32 %s136, 1
        %s265 = smul.addr %s264, 32
        %s266 = scalar_lea.vmem [#allocation10], %s265
        %s267 = smul.u32 4, %s28
        %s268 = smul.u32 4, %s28
        %p269 = scmp.eq.s32.totalorder %s28, 0
        // Predicated region
        $region49: #{tpu_custom_call.1} parent=35 // pred_check
          %p270 = pneg %p269
        $region50: #{tpu_custom_call.1} parent=35 // pred_check_branch
          %272 = sbr.rel (%p270) target = $region52
        $region51: #{tpu_custom_call.1} parent=35 // pred_region
          %s273 = smul.u32 %s27, 128
          %s274 = sld [smem:[#allocation3 + %s273]]
          %v275 = vld [vmem:[#allocation8] sm:$0xf]
          %v276 = vunpack.c.l.bf16 %v275
          %v277 = vstv %s274
          %v278 = vmul.f32 %v277, %v276
          %s279 = sadd.s32 %s273, 1
          %s280 = sld [smem:[#allocation3 + %s279]]
          %s281 = scalar_lea.vmem [#allocation8], 4
          %v282 = vld [vmem:[%s281] sm:$0xf]
          %v283 = vunpack.c.l.bf16 %v282
          %v284 = vstv %s280
          %v285 = vmul.f32 %v284, %v283
          %v286 = vadd.f32 %v278, %v285
          %s287 = sadd.s32 %s273, 2
          %s288 = sld [smem:[#allocation3 + %s287]]
          %s289 = scalar_lea.vmem [#allocation8], 8
          %v290 = vld [vmem:[%s289] sm:$0xf]
          %v291 = vunpack.c.l.bf16 %v290
          %v292 = vstv %s288
          %v293 = vmul.f32 %v292, %v291
          %v294 = vadd.f32 %v286, %v293
          %s295 = sadd.s32 %s273, 3
          %s296 = sld [smem:[#allocation3 + %s295]]
          %s297 = scalar_lea.vmem [#allocation8], 12
          %v298 = vld [vmem:[%s297] sm:$0xf]
          %v299 = vunpack.c.l.bf16 %v298
          %v300 = vstv %s296
          %v301 = vmul.f32 %v300, %v299
          %v302 = vadd.f32 %v294, %v301
          %v303 = vpack.c.bf16 %v302, %v302
          %304 = vst [vmem:[#allocation2] sm:$0xf] %v303
        $region52: #{tpu_custom_call.1} parent=35 // pred_fallthru
          _
        %v305 = vld [vmem:[#allocation2] sm:$0xf]
        %v306 = vld [vmem:[%s235] sm:$0xff]
        %v307 = vld [vmem:[%s235 + $0x8] sm:$0xff]
        %v308 = vld [vmem:[%s235 + $0x10] sm:$0xff]
        %v309 = vld [vmem:[%s235 + $0x18] sm:$0xff]
        %v310 = vld [vmem:[%s235 + $0x20] sm:$0xff]
        %v311 = vld [vmem:[%s235 + $0x28] sm:$0xff]
        %v312 = vld [vmem:[%s235 + $0x30] sm:$0xff]
        %v313 = vld [vmem:[%s235 + $0x38] sm:$0xff]
        %v314 = vld [vmem:[%s235 + $0x40] sm:$0xff]
        %v315 = vld [vmem:[%s235 + $0x48] sm:$0xff]
        %v316 = vld [vmem:[%s235 + $0x50] sm:$0xff]
        %v317 = vld [vmem:[%s235 + $0x58] sm:$0xff]
        %v318 = vld [vmem:[%s235 + $0x60] sm:$0xff]
        %v319 = vld [vmem:[%s235 + $0x68] sm:$0xff]
        %v320 = vld [vmem:[%s235 + $0x70] sm:$0xff]
        %v321 = vld [vmem:[%s235 + $0x78] sm:$0xff]
        %v322 = vld [vmem:[%s235 + $0x80] sm:$0xff]
        %v323 = vld [vmem:[%s235 + $0x88] sm:$0xff]
        %v324 = vld [vmem:[%s235 + $0x90] sm:$0xff]
        %v325 = vld [vmem:[%s235 + $0x98] sm:$0xff]
        %v326 = vld [vmem:[%s235 + $0xa0] sm:$0xff]
        %v327 = vld [vmem:[%s235 + $0xa8] sm:$0xff]
        %v328 = vld [vmem:[%s235 + $0xb0] sm:$0xff]
        %v329 = vld [vmem:[%s235 + $0xb8] sm:$0xff]
        %v330 = vld [vmem:[%s235 + $0xc0] sm:$0xff]
        %v331 = vld [vmem:[%s235 + $0xc8] sm:$0xff]
        %v332 = vld [vmem:[%s235 + $0xd0] sm:$0xff]
        %v333 = vld [vmem:[%s235 + $0xd8] sm:$0xff]
        %v334 = vld [vmem:[%s235 + $0xe0] sm:$0xff]
        %v335 = vld [vmem:[%s235 + $0xe8] sm:$0xff]
        %v336 = vld [vmem:[%s235 + $0xf0] sm:$0xff]
        %v337 = vld [vmem:[%s235 + $0xf8] sm:$0xff]
        %v338 = vld [vmem:[%s3] sm:$0xff]
        %340 = vset.pattern.permute.xlu0 0
        %341 = vperm.xlu0 %340, %v338
        %v342 = vpop.permute.xlu0 %341
        %v376 = vunpack.c.l.b16 %v306
        %v377 = vunpack.c.h.b16 %v306
        %v378 = vunpack.c.l.b16 %v307
        %v379 = vunpack.c.h.b16 %v307
        %v380 = vunpack.c.l.b16 %v308
        %v381 = vunpack.c.h.b16 %v308
        %v382 = vunpack.c.l.b16 %v309
        %v383 = vunpack.c.h.b16 %v309
        %v384 = vunpack.c.l.b16 %v310
        %v385 = vunpack.c.h.b16 %v310
        %v386 = vunpack.c.l.b16 %v311
        %v387 = vunpack.c.h.b16 %v311
        %v388 = vunpack.c.l.b16 %v312
        %v389 = vunpack.c.h.b16 %v312
        %v390 = vunpack.c.l.b16 %v313
        %v391 = vunpack.c.h.b16 %v313
        %v392 = vunpack.c.l.b16 %v314
        %v393 = vunpack.c.h.b16 %v314
        %v394 = vunpack.c.l.b16 %v315
        %v395 = vunpack.c.h.b16 %v315
        %v396 = vunpack.c.l.b16 %v316
        %v397 = vunpack.c.h.b16 %v316
        %v398 = vunpack.c.l.b16 %v317
        %v399 = vunpack.c.h.b16 %v317
        %v400 = vunpack.c.l.b16 %v318
        %v401 = vunpack.c.h.b16 %v318
        %v402 = vunpack.c.l.b16 %v319
        %v403 = vunpack.c.h.b16 %v319
        %v404 = vunpack.c.l.b16 %v320
        %v405 = vunpack.c.h.b16 %v320
        %v406 = vunpack.c.l.b16 %v321
        %v407 = vunpack.c.h.b16 %v321
        %v408 = vunpack.c.l.b16 %v322
        %v409 = vunpack.c.h.b16 %v322
        %v410 = vunpack.c.l.b16 %v323
        %v411 = vunpack.c.h.b16 %v323
        %v412 = vunpack.c.l.b16 %v324
        %v413 = vunpack.c.h.b16 %v324
        %v414 = vunpack.c.l.b16 %v325
        %v415 = vunpack.c.h.b16 %v325
        %v416 = vunpack.c.l.b16 %v326
        %v417 = vunpack.c.h.b16 %v326
        %v418 = vunpack.c.l.b16 %v327
        %v419 = vunpack.c.h.b16 %v327
        %v420 = vunpack.c.l.b16 %v328
        %v421 = vunpack.c.h.b16 %v328
        %v422 = vunpack.c.l.b16 %v329
        %v423 = vunpack.c.h.b16 %v329
        %v424 = vunpack.c.l.b16 %v330
        %v425 = vunpack.c.h.b16 %v330
        %v426 = vunpack.c.l.b16 %v331
        %v427 = vunpack.c.h.b16 %v331
        %v428 = vunpack.c.l.b16 %v332
        %v429 = vunpack.c.h.b16 %v332
        %v430 = vunpack.c.l.b16 %v333
        %v431 = vunpack.c.h.b16 %v333
        %v432 = vunpack.c.l.b16 %v334
        %v433 = vunpack.c.h.b16 %v334
        %v434 = vunpack.c.l.b16 %v335
        %v435 = vunpack.c.h.b16 %v335
        %v436 = vunpack.c.l.b16 %v336
        %v437 = vunpack.c.h.b16 %v336
        %v438 = vunpack.c.l.b16 %v337
        %v439 = vunpack.c.h.b16 %v337
        %v440 = vpack.c.b16 %v380, %v376
        %v441 = vpack.c.b16 %v381, %v377
        %v442 = vpack.c.b16 %v382, %v378
        %v443 = vpack.c.b16 %v383, %v379
        %v444 = vpack.c.b16 %v388, %v384
        %v445 = vpack.c.b16 %v389, %v385
        %v446 = vpack.c.b16 %v390, %v386
        %v447 = vpack.c.b16 %v391, %v387
        %v448 = vpack.c.b16 %v396, %v392
        %v449 = vpack.c.b16 %v397, %v393
        %v450 = vpack.c.b16 %v398, %v394
        %v451 = vpack.c.b16 %v399, %v395
        %v452 = vpack.c.b16 %v404, %v400
        %v453 = vpack.c.b16 %v405, %v401
        %v454 = vpack.c.b16 %v406, %v402
        %v455 = vpack.c.b16 %v407, %v403
        %v456 = vpack.c.b16 %v412, %v408
        %v457 = vpack.c.b16 %v413, %v409
        %v458 = vpack.c.b16 %v414, %v410
        %v459 = vpack.c.b16 %v415, %v411
        %v460 = vpack.c.b16 %v420, %v416
        %v461 = vpack.c.b16 %v421, %v417
        %v462 = vpack.c.b16 %v422, %v418
        %v463 = vpack.c.b16 %v423, %v419
        %v464 = vpack.c.b16 %v428, %v424
        %v465 = vpack.c.b16 %v429, %v425
        %v466 = vpack.c.b16 %v430, %v426
        %v467 = vpack.c.b16 %v431, %v427
        %v468 = vpack.c.b16 %v436, %v432
        %v469 = vpack.c.b16 %v437, %v433
        %v470 = vpack.c.b16 %v438, %v434
        %v471 = vpack.c.b16 %v439, %v435
        %504 = vmatpush.bf16.msra.mxu0 %v468
        %505 = vmatpush.bf16.msra.mxu0 %v464
        %506 = vmatpush.bf16.msra.mxu0 %v460
        %507 = vmatpush.bf16.msra.mxu0 %v456
        %508 = vmatpush.bf16.msra.mxu0 %v452
        %509 = vmatpush.bf16.msra.mxu0 %v448
        %510 = vmatpush.bf16.msra.mxu0 %v444
        %511 = vmatpush.bf16.msra.mxu0 %v440
        %512 = vmatmul.bf16.gmra.mxu0 %v305
        %v513 = vpop.f32.mrf.mxu0
        %v514 = vadd.f32 %v342, %v513
        %v515 = vpop.f32.mrf.mxu0
        %516 = vdwg.mxu0
        %517 = vmatpush.bf16.msra.mxu0 %v469
        %518 = vmatpush.bf16.msra.mxu0 %v465
        %519 = vmatpush.bf16.msra.mxu0 %v461
        %520 = vmatpush.bf16.msra.mxu0 %v457
        %521 = vmatpush.bf16.msra.mxu0 %v453
        %522 = vmatpush.bf16.msra.mxu0 %v449
        %523 = vmatpush.bf16.msra.mxu0 %v445
        %524 = vmatpush.bf16.msra.mxu0 %v441
        %525 = vmatmul.bf16.gmra.mxu0 %v305
        %v526 = vpop.f32.mrf.mxu0
        %v527 = vadd.f32 %v342, %v526
        %v528 = vpop.f32.mrf.mxu0
        %529 = vdwg.mxu0
        %530 = vmatpush.bf16.msra.mxu0 %v470
        %531 = vmatpush.bf16.msra.mxu0 %v466
        %532 = vmatpush.bf16.msra.mxu0 %v462
        %533 = vmatpush.bf16.msra.mxu0 %v458
        %534 = vmatpush.bf16.msra.mxu0 %v454
        %535 = vmatpush.bf16.msra.mxu0 %v450
        %536 = vmatpush.bf16.msra.mxu0 %v446
        %537 = vmatpush.bf16.msra.mxu0 %v442
        %538 = vmatmul.bf16.gmra.mxu0 %v305
        %v539 = vpop.f32.mrf.mxu0
        %v540 = vadd.f32 %v342, %v539
        %v541 = vpop.f32.mrf.mxu0
        %542 = vdwg.mxu0
        %543 = vmatpush.bf16.msra.mxu0 %v471
        %544 = vmatpush.bf16.msra.mxu0 %v467
        %545 = vmatpush.bf16.msra.mxu0 %v463
        %546 = vmatpush.bf16.msra.mxu0 %v459
        %547 = vmatpush.bf16.msra.mxu0 %v455
        %548 = vmatpush.bf16.msra.mxu0 %v451
        %549 = vmatpush.bf16.msra.mxu0 %v447
        %550 = vmatpush.bf16.msra.mxu0 %v443
        %551 = vmatmul.bf16.gmra.mxu0 %v305
        %v552 = vpop.f32.mrf.mxu0
        %v553 = vadd.f32 %v342, %v552
        %v554 = vpop.f32.mrf.mxu0
        %555 = vdwg.mxu0
        %556 = vst [vmem:[%s266] sm:$0xff] %v514
        %557 = vst [vmem:[%s266 + $0x8] sm:$0xff] %v527
        %558 = vst [vmem:[%s266 + $0x10] sm:$0xff] %v540
        %559 = vst [vmem:[%s266 + $0x18] sm:$0xff] %v553
        %s560 = sand.u32 %s136, 1
        %s561 = scalar_lea.sflag [#allocation5], %s560
        %s562 = sand.u32 %s136, 1
        %s563 = smul.addr %s562, 32
        %s564 = scalar_lea.vmem [#allocation10], %s563
        // Predicated region
        $region53: #{tpu_custom_call.1} parent=35 // pred_check
          %p565 = pneg %p146
        $region54: #{tpu_custom_call.1} parent=35 // pred_check_branch
          %567 = sbr.rel (%p565) target = $region56
        $region55: #{tpu_custom_call.1} parent=35 // pred_region
          %s568 = smul.u32 4, %s28
          %570 = vsyncadd %s561, 0
          %s571 = smul.addr %s27, 4
          %s572 = sadd.s32 %s568, %s571
          %s573 = smul.addr %s572, 8
          %s574 = scalar_lea.hbm %s4, %s573
          %s576 = sshll.u32 %s564, 4
          %s577 = int_to_ptr.vmem [resolvable:$true] %s576
          %s578 = sshll.u32 %s574, 4
          %s579 = int_to_ptr.hbm [resolvable:$true] %s578
          %581 = dma.vmem_to_hbm [thread:$0]  %s577, 512, %s579, %s561
        $region56: #{tpu_custom_call.1} parent=35 // pred_fallthru
          _
      $region36: #{tpu_custom_call.1} parent=5 // pred_fallthru
        _
      %p582 = scmp.le.s32.totalorder 2, %s18
      // Predicated region
      $region57: #{tpu_custom_call.1} parent=5 // pred_check
        %p583 = pneg %p582
      $region58: #{tpu_custom_call.1} parent=5 // pred_check_branch
        %585 = sbr.rel (%p583) target = $region60
      $region59: #{tpu_custom_call.1} parent=5 // pred_region
        %s586 = ssub.s32 %s18, 2
        // Predicated region
        $region61: #{tpu_custom_call.1} parent=59 // pred_check
          %p587 = pneg %p152
        $region62: #{tpu_custom_call.1} parent=59 // pred_check_branch
          %589 = sbr.rel (%p587) target = $region64
        $region63: #{tpu_custom_call.1} parent=59 // pred_region
          %s590 = sand.u32 %s137, 1
          %s591 = scalar_lea.sflag [#allocation5], %s590
          %s592 = sand.u32 %s137, 1
          %s593 = smul.addr %s592, 32
          %s594 = scalar_lea.vmem [#allocation10], %s593
          %596 = dma.done %s591, 512
        $region64: #{tpu_custom_call.1} parent=59 // pred_fallthru
          _
      $region60: #{tpu_custom_call.1} parent=5 // pred_fallthru
        _
    $region6: #{tpu_custom_call.1} parent=1 // loop_footer
      %s22 = sadd.s32 1, %s18
    $region7: #{tpu_custom_call.1} parent=1 // loop_footer_branch
      %17 = sbr.rel target = $region3
    $region8: #{tpu_custom_call.1} parent=1 // loop_exit
      _
    %597 = vsyncpa [#allocation4], 1
    %s598 = scalar_lea.sflag [#allocation4], 1
    %599 = vsyncpa %s598, 1
    %600 = vsyncpa [#allocation9], 1
    %601 = vsyncpa [#allocation5], 1
    %s602 = scalar_lea.sflag [#allocation5], 1
    %603 = vsyncpa %s602, 1
    %604 = vsyncpa [#allocation6], 1
    %s605 = scalar_lea.sflag [#allocation6], 1
    %606 = vsyncpa %s605, 1

</llo_original>
